<compile_context>
chip_gen: v7x
topology: tpu7x:2x2x1
jax: 0.10.0
libtpu: 0.0.40
codegen_flags: <defaults>
</compile_context>

<pallas_src>
import functools
import math

import jax
import jax.numpy as jnp
from jax.experimental import pallas as pl
from jax.experimental.pallas import tpu as pltpu


# ---------------------------------------------------------------------------
# Generic fused linear:  (T, d_in) @ (d_in, d_out) + bias
# ---------------------------------------------------------------------------
def _linear_kernel(x_ref, w_ref, b_ref, o_ref):
    # MXU matmul in native dtype, f32 accumulation; bias add in f32.
    y = jnp.dot(x_ref[...], w_ref[...], preferred_element_type=jnp.float32)
    y = y + b_ref[...].astype(jnp.float32)
    o_ref[...] = y.astype(o_ref.dtype)


def _linear(x2d, w, b, *, token_tile=128):
    """x2d: (T, d_in), w: (d_in, d_out), b: (d_out,) -> (T, d_out)."""
    T, d_in = x2d.shape
    d_out = w.shape[1]
    grid_t = pl.cdiv(T, token_tile)
    Tp = grid_t * token_tile
    if Tp != T:                       # pad to the tile instead of asserting
        x2d = jnp.pad(x2d, ((0, Tp - T), (0, 0)))
    b2 = b.reshape(1, d_out)

    out = pl.pallas_call(
        _linear_kernel,
        out_shape=jax.ShapeDtypeStruct((Tp, d_out), x2d.dtype),
        grid_spec=pltpu.PrefetchScalarGridSpec(
            num_scalar_prefetch=0,
            grid=(grid_t,),
            in_specs=[
                pl.BlockSpec((token_tile, d_in), lambda i: (i, 0)),   # x tile
                pl.BlockSpec((d_in, d_out), lambda i: (0, 0)),        # W (resident)
                pl.BlockSpec((1, d_out), lambda i: (0, 0)),           # bias
            ],
            out_specs=pl.BlockSpec((token_tile, d_out), lambda i: (i, 0)),
        ),
        compiler_params=pltpu.CompilerParams(
            dimension_semantics=("parallel",)),
    )(x2d, w, b2)
    return out[:T] if Tp != T else out


# ---------------------------------------------------------------------------
# Attention core: one (batch, head) per grid step; full K/V resident.
# ---------------------------------------------------------------------------
def _attention_kernel(q_ref, k_ref, v_ref, mask_ref, o_ref, w_ref, *, scale):
    q = q_ref[0]                                   # (L, D)
    k = k_ref[0]                                   # (S, D)
    v = v_ref[0]                                   # (S, D)

    # scores = q k^T (MXU, f32 accumulate); scale + mask applied in f32
    s = jax.lax.dot_general(q, k, (((1,), (1,)), ((), ())),
                            preferred_element_type=jnp.float32)
    s = s * scale + mask_ref[...].astype(jnp.float32)

    # numerically stable softmax in f32
    m = jnp.max(s, axis=-1, keepdims=True)
    p = jnp.exp(s - m)
    p = p / jnp.sum(p, axis=-1, keepdims=True)

    # weighted sum of values (MXU)
    o = jnp.dot(p.astype(v.dtype), v, preferred_element_type=jnp.float32)

    o_ref[0] = o.astype(o_ref.dtype)
    w_ref[0] = p.astype(w_ref.dtype)


def _attention_core(qh, kh, vh, mask, *, scale):
    """qh: (B, L, D), kh/vh: (B, S, D), mask: (L, S) additive float."""
    B, L, D = qh.shape
    S = kh.shape[1]
    isz = qh.dtype.itemsize
    cost = pl.CostEstimate(
        flops=B * 4 * L * S * D,
        transcendentals=B * L * S,
        bytes_accessed=(qh.size + kh.size + vh.size) * isz
        + B * L * (D + S) * isz
        + mask.size * mask.dtype.itemsize,
    )

    out, wts = pl.pallas_call(
        functools.partial(_attention_kernel, scale=scale),
        out_shape=(
            jax.ShapeDtypeStruct((B, L, D), qh.dtype),
            jax.ShapeDtypeStruct((B, L, S), qh.dtype),
        ),
        grid_spec=pltpu.PrefetchScalarGridSpec(
            num_scalar_prefetch=0,
            grid=(B,),
            in_specs=[
                pl.BlockSpec((1, L, D), lambda b: (b, 0, 0)),
                pl.BlockSpec((1, S, D), lambda b: (b, 0, 0)),
                pl.BlockSpec((1, S, D), lambda b: (b, 0, 0)),
                pl.BlockSpec((L, S), lambda b: (0, 0)),       # shared mask
            ],
            out_specs=[
                pl.BlockSpec((1, L, D), lambda b: (b, 0, 0)),
                pl.BlockSpec((1, L, S), lambda b: (b, 0, 0)),
            ],
        ),
        compiler_params=pltpu.CompilerParams(
            dimension_semantics=("parallel",)),
        cost_estimate=cost,
    )(qh, kh, vh, mask)
    return out, wts


# ---------------------------------------------------------------------------
# Full multi-head attention forward
# ---------------------------------------------------------------------------
@functools.partial(jax.jit, static_argnames=("heads",))
def mha_forward(q, k, v, params, *, heads, attn_mask=None):
    L, N, E = q.shape
    S = k.shape[0]
    assert E % heads == 0
    D = E // heads

    # in-projections (token-major Pallas GEMMs)
    qp = _linear(q.reshape(L * N, E), params["wq"], params["bq"])
    kp = _linear(k.reshape(S * N, E), params["wk"], params["bk"])
    vp = _linear(v.reshape(S * N, E), params["wv"], params["bv"])

    # split heads: (T, N, H, D) -> (N*H, T, D)
    qh = qp.reshape(L, N, heads, D).transpose(1, 2, 0, 3).reshape(N * heads, L, D)
    kh = kp.reshape(S, N, heads, D).transpose(1, 2, 0, 3).reshape(N * heads, S, D)
    vh = vp.reshape(S, N, heads, D).transpose(1, 2, 0, 3).reshape(N * heads, S, D)

    if attn_mask is None:
        mask = jnp.zeros((L, S), jnp.float32)
    else:
        mask = attn_mask.astype(jnp.float32)

    oh, wh = _attention_core(qh, kh, vh, mask, scale=1.0 / math.sqrt(D))

    # merge heads and out-project
    o = oh.reshape(N, heads, L, D).transpose(2, 0, 1, 3).reshape(L * N, E)
    out = _linear(o, params["wo"], params["bo"]).reshape(L, N, E)

    attn_weights = wh.reshape(N, heads, L, S).mean(axis=1)   # (N, L, S)
    return out, attn_weights


# ---------------------------------------------------------------------------
# Reference (pure JAX, HIGHEST matmul precision) + deterministic init
# ---------------------------------------------------------------------------
def init_mha_params(key, nhid, dtype=jnp.float32):
    ks = jax.random.split(key, 8)
    bound = 1.0 / math.sqrt(nhid)

    def u(kk, shape):
        return jax.random.uniform(kk, shape, dtype, -bound, bound)

    return {
        "wq": u(ks[0], (nhid, nhid)), "bq": u(ks[1], (nhid,)),
        "wk": u(ks[2], (nhid, nhid)), "bk": u(ks[3], (nhid,)),
        "wv": u(ks[4], (nhid, nhid)), "bv": u(ks[5], (nhid,)),
        "wo": u(ks[6], (nhid, nhid)), "bo": u(ks[7], (nhid,)),
    }


def mha_reference(q, k, v, params, heads, attn_mask=None):
    L, N, E = q.shape
    S = k.shape[0]
    D = E // heads
    hp = jax.lax.Precision.HIGHEST
    qp = jnp.einsum("lne,ef->lnf", q, params["wq"], precision=hp) + params["bq"]
    kp = jnp.einsum("sne,ef->snf", k, params["wk"], precision=hp) + params["bk"]
    vp = jnp.einsum("sne,ef->snf", v, params["wv"], precision=hp) + params["bv"]
    qh = qp.reshape(L, N, heads, D).transpose(1, 2, 0, 3)
    kh = kp.reshape(S, N, heads, D).transpose(1, 2, 0, 3)
    vh = vp.reshape(S, N, heads, D).transpose(1, 2, 0, 3)
    s = jnp.einsum("nhld,nhsd->nhls", qh, kh, precision=hp) / math.sqrt(D)
    if attn_mask is not None:
        s = s + attn_mask
    w = jax.nn.softmax(s, axis=-1)
    o = jnp.einsum("nhls,nhsd->nhld", w, vh, precision=hp)
    o = o.transpose(2, 0, 1, 3).reshape(L * N, E)
    out = (jnp.einsum("te,ef->tf", o, params["wo"], precision=hp)
           + params["bo"]).reshape(L, N, E)
    return out, w.mean(axis=1)


if __name__ == "__main__":
    L = S = 128    # target / source sequence length (lane-dense scores)
    N = 2          # batch
    E = 128        # nhid (multiple of 128 -> lane-dense outputs)
    H = 2          # heads

    key = jax.random.PRNGKey(0)
    kq, kk, kv, kp = jax.random.split(key, 4)
    q = jax.random.normal(kq, (L, N, E), jnp.float32)
    k = jax.random.normal(kk, (S, N, E), jnp.float32)
    v = jax.random.normal(kv, (S, N, E), jnp.float32)
    params = init_mha_params(kp, E)

    # additive causal mask (large finite negative instead of -inf for robustness)
    causal = jnp.where(jnp.arange(L)[:, None] >= jnp.arange(S)[None, :],
                       0.0, -1e9).astype(jnp.float32)

    for mask in (None, causal):
        out, attn_w = mha_forward(q, k, v, params, heads=H, attn_mask=mask)
        out, attn_w = jax.block_until_ready((out, attn_w))
        ref_out, ref_w = mha_reference(q, k, v, params, H, attn_mask=mask)
        assert out.shape == (L, N, E) and attn_w.shape == (N, L, S)
        # MXU f32 pass decomposition vs XLA HIGHEST can differ slightly.
        assert jnp.allclose(out, ref_out, atol=1e-2, rtol=1e-2), "output mismatch"
        assert jnp.allclose(attn_w, ref_w, atol=1e-3), "attn-weights mismatch"

    print("KERNEL_OK")
</pallas_src>

<mosaic_0001>
module attributes {stable_mosaic.version = 11 : i64} {
  func.func @_linear_kernel(%arg0: i32, %arg1: memref<128x128xf32, #tpu.memory_space<vmem>>, %arg2: memref<128x128xf32, #tpu.memory_space<vmem>>, %arg3: memref<1x128xf32, #tpu.memory_space<vmem>>, %arg4: memref<128x128xf32, #tpu.memory_space<vmem>>) attributes {dimension_semantics = [#tpu.dimension_semantics<parallel>], iteration_bounds = array<i64: 2>, scalar_prefetch = 0 : i64, scratch_operands = 0 : i64, tpu.core_type = #tpu.core_type<tc>, window_params = [{transform_indices = @transform_0, window_bounds = array<i64: 128, 128>}, {pipeline_mode = #tpu.pipeline_mode<synchronous>, transform_indices = @transform_1, window_bounds = array<i64: 128, 128>}, {pipeline_mode = #tpu.pipeline_mode<synchronous>, transform_indices = @transform_2, window_bounds = array<i64: 1, 128>}, {transform_indices = @transform_3, window_bounds = array<i64: 128, 128>}]} {
    %c0 = arith.constant 0 : index
    %c0_0 = arith.constant 0 : index
    %0 = vector.load %arg1[%c0, %c0_0] : memref<128x128xf32, #tpu.memory_space<vmem>>, vector<128x128xf32>
    %c0_1 = arith.constant 0 : index
    %c0_2 = arith.constant 0 : index
    %1 = vector.load %arg2[%c0_1, %c0_2] : memref<128x128xf32, #tpu.memory_space<vmem>>, vector<128x128xf32>
    %cst = arith.constant dense<0.000000e+00> : vector<128x128xf32>
    %2 = tpu.matmul %0, %1, %cst {dimension_numbers = #tpu.dot_dimension_numbers<[1], [0], [0], [1], [0, 0, 1, 1], [], []>} : vector<128x128xf32>, vector<128x128xf32>, vector<128x128xf32> -> vector<128x128xf32>
    %c0_3 = arith.constant 0 : index
    %c0_4 = arith.constant 0 : index
    %3 = vector.load %arg3[%c0_3, %c0_4] : memref<1x128xf32, #tpu.memory_space<vmem>>, vector<1x128xf32>
    %4 = vector.broadcast %3 : vector<1x128xf32> to vector<128x128xf32>
    %5 = arith.addf %2, %4 : vector<128x128xf32>
    %c0_5 = arith.constant 0 : index
    %c0_6 = arith.constant 0 : index
    %6 = vector.load %arg4[%c0_5, %c0_6] : memref<128x128xf32, #tpu.memory_space<vmem>>, vector<128x128xf32>
    tpu.vector_store %arg4[%c0_5, %c0_6], %5 {strides = array<i32>} : memref<128x128xf32, #tpu.memory_space<vmem>>, vector<128x128xf32>,
    return
  }
  func.func @transform_0(%arg0: i32) -> (i32, i32) {
    %c0_i32 = arith.constant 0 : i32
    %c0_i32_0 = arith.constant 0 : i32
    return %arg0, %c0_i32 : i32, i32
  }
  func.func @transform_1(%arg0: i32) -> (i32, i32) {
    %c0_i32 = arith.constant 0 : i32
    %c0_i32_0 = arith.constant 0 : i32
    %c0_i32_1 = arith.constant 0 : i32
    return %c0_i32, %c0_i32_0 : i32, i32
  }
  func.func @transform_2(%arg0: i32) -> (i32, i32) {
    %c0_i32 = arith.constant 0 : i32
    %c0_i32_0 = arith.constant 0 : i32
    %c0_i32_1 = arith.constant 0 : i32
    return %c0_i32, %c0_i32_0 : i32, i32
  }
  func.func @transform_3(%arg0: i32) -> (i32, i32) {
    %c0_i32 = arith.constant 0 : i32
    %c0_i32_0 = arith.constant 0 : i32
    return %arg0, %c0_i32 : i32, i32
  }
}

module attributes {stable_mosaic.version = 11 : i64} {
  func.func @_linear_kernel(%arg0: i32, %arg1: memref<128x128xf32, #tpu.memory_space<vmem>>, %arg2: memref<128x128xf32, #tpu.memory_space<vmem>>, %arg3: memref<1x128xf32, #tpu.memory_space<vmem>>, %arg4: memref<128x128xf32, #tpu.memory_space<vmem>>) attributes {dimension_semantics = [#tpu.dimension_semantics<parallel>], iteration_bounds = array<i64: 2>, scalar_prefetch = 0 : i64, scratch_operands = 0 : i64, tpu.core_type = #tpu.core_type<tc>, window_params = [{transform_indices = @transform_0, window_bounds = array<i64: 128, 128>}, {pipeline_mode = #tpu.pipeline_mode<synchronous>, transform_indices = @transform_1, window_bounds = array<i64: 128, 128>}, {pipeline_mode = #tpu.pipeline_mode<synchronous>, transform_indices = @transform_2, window_bounds = array<i64: 1, 128>}, {transform_indices = @transform_3, window_bounds = array<i64: 128, 128>}]} {
    %c0 = arith.constant 0 : index
    %c0_0 = arith.constant 0 : index
    %0 = vector.load %arg1[%c0, %c0_0] : memref<128x128xf32, #tpu.memory_space<vmem>>, vector<128x128xf32>
    %c0_1 = arith.constant 0 : index
    %c0_2 = arith.constant 0 : index
    %1 = vector.load %arg2[%c0_1, %c0_2] : memref<128x128xf32, #tpu.memory_space<vmem>>, vector<128x128xf32>
    %cst = arith.constant dense<0.000000e+00> : vector<128x128xf32>
    %2 = tpu.matmul %0, %1, %cst {dimension_numbers = #tpu.dot_dimension_numbers<[1], [0], [0], [1], [0, 0, 1, 1], [], []>} : vector<128x128xf32>, vector<128x128xf32>, vector<128x128xf32> -> vector<128x128xf32>
    %c0_3 = arith.constant 0 : index
    %c0_4 = arith.constant 0 : index
    %3 = vector.load %arg3[%c0_3, %c0_4] : memref<1x128xf32, #tpu.memory_space<vmem>>, vector<1x128xf32>
    %4 = vector.broadcast %3 : vector<1x128xf32> to vector<128x128xf32>
    %5 = arith.addf %2, %4 : vector<128x128xf32>
    %c0_5 = arith.constant 0 : index
    %c0_6 = arith.constant 0 : index
    %6 = vector.load %arg4[%c0_5, %c0_6] : memref<128x128xf32, #tpu.memory_space<vmem>>, vector<128x128xf32>
    tpu.vector_store %arg4[%c0_5, %c0_6], %5 {strides = array<i32>} : memref<128x128xf32, #tpu.memory_space<vmem>>, vector<128x128xf32>,
    return
  }
  func.func @transform_0(%arg0: i32) -> (i32, i32) {
    %c0_i32 = arith.constant 0 : i32
    %c0_i32_0 = arith.constant 0 : i32
    return %arg0, %c0_i32 : i32, i32
  }
  func.func @transform_1(%arg0: i32) -> (i32, i32) {
    %c0_i32 = arith.constant 0 : i32
    %c0_i32_0 = arith.constant 0 : i32
    %c0_i32_1 = arith.constant 0 : i32
    return %c0_i32, %c0_i32_0 : i32, i32
  }
  func.func @transform_2(%arg0: i32) -> (i32, i32) {
    %c0_i32 = arith.constant 0 : i32
    %c0_i32_0 = arith.constant 0 : i32
    %c0_i32_1 = arith.constant 0 : i32
    return %c0_i32, %c0_i32_0 : i32, i32
  }
  func.func @transform_3(%arg0: i32) -> (i32, i32) {
    %c0_i32 = arith.constant 0 : i32
    %c0_i32_0 = arith.constant 0 : i32
    return %arg0, %c0_i32 : i32, i32
  }
}

module attributes {stable_mosaic.version = 11 : i64} {
  func.func @_attention_kernel(%arg0: i32, %arg1: memref<1x128x64xf32, #tpu.memory_space<vmem>>, %arg2: memref<1x128x64xf32, #tpu.memory_space<vmem>>, %arg3: memref<1x128x64xf32, #tpu.memory_space<vmem>>, %arg4: memref<128x128xf32, #tpu.memory_space<vmem>>, %arg5: memref<1x128x64xf32, #tpu.memory_space<vmem>>, %arg6: memref<1x128x128xf32, #tpu.memory_space<vmem>>) attributes {dimension_semantics = [#tpu.dimension_semantics<parallel>], iteration_bounds = array<i64: 4>, scalar_prefetch = 0 : i64, scratch_operands = 0 : i64, tpu.core_type = #tpu.core_type<tc>, window_params = [{transform_indices = @transform_0, window_bounds = array<i64: 1, 128, 64>}, {transform_indices = @transform_1, window_bounds = array<i64: 1, 128, 64>}, {transform_indices = @transform_2, window_bounds = array<i64: 1, 128, 64>}, {pipeline_mode = #tpu.pipeline_mode<synchronous>, transform_indices = @transform_3, window_bounds = array<i64: 128, 128>}, {transform_indices = @transform_4, window_bounds = array<i64: 1, 128, 64>}, {transform_indices = @transform_5, window_bounds = array<i64: 1, 128, 128>}]} {
    %c0 = arith.constant 0 : index
    %c0_0 = arith.constant 0 : index
    %c0_1 = arith.constant 0 : index
    %0 = vector.load %arg1[%c0, %c0_0, %c0_1] : memref<1x128x64xf32, #tpu.memory_space<vmem>>, vector<1x128x64xf32>
    %1 = vector.shape_cast %0 : vector<1x128x64xf32> to vector<128x64xf32>
    %c0_2 = arith.constant 0 : index
    %c0_3 = arith.constant 0 : index
    %c0_4 = arith.constant 0 : index
    %2 = vector.load %arg2[%c0_2, %c0_3, %c0_4] : memref<1x128x64xf32, #tpu.memory_space<vmem>>, vector<1x128x64xf32>
    %3 = vector.shape_cast %2 : vector<1x128x64xf32> to vector<128x64xf32>
    %c0_5 = arith.constant 0 : index
    %c0_6 = arith.constant 0 : index
    %c0_7 = arith.constant 0 : index
    %4 = vector.load %arg3[%c0_5, %c0_6, %c0_7] : memref<1x128x64xf32, #tpu.memory_space<vmem>>, vector<1x128x64xf32>
    %5 = vector.shape_cast %4 : vector<1x128x64xf32> to vector<128x64xf32>
    %cst = arith.constant dense<0.000000e+00> : vector<128x128xf32>
    %6 = tpu.matmul %1, %3, %cst {dimension_numbers = #tpu.dot_dimension_numbers<[1], [1], [0], [0], [0, 0, 1, 0], [], []>} : vector<128x64xf32>, vector<128x64xf32>, vector<128x128xf32> -> vector<128x128xf32>
    %cst_8 = arith.constant 1.250000e-01 : f32
    %7 = vector.broadcast %cst_8 : f32 to vector<128x128xf32>
    %8 = arith.mulf %6, %7 : vector<128x128xf32>
    %c0_9 = arith.constant 0 : index
    %c0_10 = arith.constant 0 : index
    %9 = vector.load %arg4[%c0_9, %c0_10] : memref<128x128xf32, #tpu.memory_space<vmem>>, vector<128x128xf32>
    %10 = arith.addf %8, %9 : vector<128x128xf32>
    %cst_11 = arith.constant dense<0xFF800000> : vector<128xf32>
    %11 = vector.multi_reduction <maximumf>, %10, %cst_11 [1] : vector<128x128xf32> to vector<128xf32>
    %12 = vector.shape_cast %11 : vector<128xf32> to vector<128x1xf32>
    %13 = vector.broadcast %12 : vector<128x1xf32> to vector<128x128xf32>
    %14 = arith.subf %10, %13 : vector<128x128xf32>
    %15 = math.exp %14 : vector<128x128xf32>
    %cst_12 = arith.constant dense<0.000000e+00> : vector<128xf32>
    %16 = vector.multi_reduction <add>, %15, %cst_12 [1] : vector<128x128xf32> to vector<128xf32>
    %17 = vector.shape_cast %16 : vector<128xf32> to vector<128x1xf32>
    %18 = vector.broadcast %17 : vector<128x1xf32> to vector<128x128xf32>
    %19 = arith.divf %15, %18 : vector<128x128xf32>
    %cst_13 = arith.constant dense<0.000000e+00> : vector<128x64xf32>
    %20 = tpu.matmul %19, %5, %cst_13 {dimension_numbers = #tpu.dot_dimension_numbers<[1], [0], [0], [1], [0, 0, 1, 1], [], []>} : vector<128x128xf32>, vector<128x64xf32>, vector<128x64xf32> -> vector<128x64xf32>
    %c0_14 = arith.constant 0 : index
    %c0_15 = arith.constant 0 : index
    %c0_16 = arith.constant 0 : index
    %21 = vector.load %arg5[%c0_14, %c0_15, %c0_16] : memref<1x128x64xf32, #tpu.memory_space<vmem>>, vector<1x128x64xf32>
    %22 = vector.shape_cast %21 : vector<1x128x64xf32> to vector<128x64xf32>
    %23 = vector.shape_cast %20 : vector<128x64xf32> to vector<1x128x64xf32>
    tpu.vector_store %arg5[%c0_14, %c0_15, %c0_16], %23 {strides = array<i32>} : memref<1x128x64xf32, #tpu.memory_space<vmem>>, vector<1x128x64xf32>,
    %c0_17 = arith.constant 0 : index
    %c0_18 = arith.constant 0 : index
    %c0_19 = arith.constant 0 : index
    %24 = vector.load %arg6[%c0_17, %c0_18, %c0_19] : memref<1x128x128xf32, #tpu.memory_space<vmem>>, vector<1x128x128xf32>
    %25 = vector.shape_cast %24 : vector<1x128x128xf32> to vector<128x128xf32>
    %26 = vector.shape_cast %19 : vector<128x128xf32> to vector<1x128x128xf32>
    tpu.vector_store %arg6[%c0_17, %c0_18, %c0_19], %26 {strides = array<i32>} : memref<1x128x128xf32, #tpu.memory_space<vmem>>, vector<1x128x128xf32>,
    return
  }
  func.func @transform_0(%arg0: i32) -> (i32, i32, i32) {
    %c0_i32 = arith.constant 0 : i32
    %c0_i32_0 = arith.constant 0 : i32
    %c0_i32_1 = arith.constant 0 : i32
    return %arg0, %c0_i32, %c0_i32_0 : i32, i32, i32
  }
  func.func @transform_1(%arg0: i32) -> (i32, i32, i32) {
    %c0_i32 = arith.constant 0 : i32
    %c0_i32_0 = arith.constant 0 : i32
    %c0_i32_1 = arith.constant 0 : i32
    return %arg0, %c0_i32, %c0_i32_0 : i32, i32, i32
  }
  func.func @transform_2(%arg0: i32) -> (i32, i32, i32) {
    %c0_i32 = arith.constant 0 : i32
    %c0_i32_0 = arith.constant 0 : i32
    %c0_i32_1 = arith.constant 0 : i32
    return %arg0, %c0_i32, %c0_i32_0 : i32, i32, i32
  }
  func.func @transform_3(%arg0: i32) -> (i32, i32) {
    %c0_i32 = arith.constant 0 : i32
    %c0_i32_0 = arith.constant 0 : i32
    %c0_i32_1 = arith.constant 0 : i32
    return %c0_i32, %c0_i32_0 : i32, i32
  }
  func.func @transform_4(%arg0: i32) -> (i32, i32, i32) {
    %c0_i32 = arith.constant 0 : i32
    %c0_i32_0 = arith.constant 0 : i32
    %c0_i32_1 = arith.constant 0 : i32
    return %arg0, %c0_i32, %c0_i32_0 : i32, i32, i32
  }
  func.func @transform_5(%arg0: i32) -> (i32, i32, i32) {
    %c0_i32 = arith.constant 0 : i32
    %c0_i32_0 = arith.constant 0 : i32
    %c0_i32_1 = arith.constant 0 : i32
    return %arg0, %c0_i32, %c0_i32_0 : i32, i32, i32
  }
}

module attributes {stable_mosaic.version = 11 : i64} {
  func.func @_linear_kernel(%arg0: i32, %arg1: memref<128x128xf32, #tpu.memory_space<vmem>>, %arg2: memref<128x128xf32, #tpu.memory_space<vmem>>, %arg3: memref<1x128xf32, #tpu.memory_space<vmem>>, %arg4: memref<128x128xf32, #tpu.memory_space<vmem>>) attributes {dimension_semantics = [#tpu.dimension_semantics<parallel>], iteration_bounds = array<i64: 2>, scalar_prefetch = 0 : i64, scratch_operands = 0 : i64, tpu.core_type = #tpu.core_type<tc>, window_params = [{transform_indices = @transform_0, window_bounds = array<i64: 128, 128>}, {pipeline_mode = #tpu.pipeline_mode<synchronous>, transform_indices = @transform_1, window_bounds = array<i64: 128, 128>}, {pipeline_mode = #tpu.pipeline_mode<synchronous>, transform_indices = @transform_2, window_bounds = array<i64: 1, 128>}, {transform_indices = @transform_3, window_bounds = array<i64: 128, 128>}]} {
    %c0 = arith.constant 0 : index
    %c0_0 = arith.constant 0 : index
    %0 = vector.load %arg1[%c0, %c0_0] : memref<128x128xf32, #tpu.memory_space<vmem>>, vector<128x128xf32>
    %c0_1 = arith.constant 0 : index
    %c0_2 = arith.constant 0 : index
    %1 = vector.load %arg2[%c0_1, %c0_2] : memref<128x128xf32, #tpu.memory_space<vmem>>, vector<128x128xf32>
    %cst = arith.constant dense<0.000000e+00> : vector<128x128xf32>
    %2 = tpu.matmul %0, %1, %cst {dimension_numbers = #tpu.dot_dimension_numbers<[1], [0], [0], [1], [0, 0, 1, 1], [], []>} : vector<128x128xf32>, vector<128x128xf32>, vector<128x128xf32> -> vector<128x128xf32>
    %c0_3 = arith.constant 0 : index
    %c0_4 = arith.constant 0 : index
    %3 = vector.load %arg3[%c0_3, %c0_4] : memref<1x128xf32, #tpu.memory_space<vmem>>, vector<1x128xf32>
    %4 = vector.broadcast %3 : vector<1x128xf32> to vector<128x128xf32>
    %5 = arith.addf %2, %4 : vector<128x128xf32>
    %c0_5 = arith.constant 0 : index
    %c0_6 = arith.constant 0 : index
    %6 = vector.load %arg4[%c0_5, %c0_6] : memref<128x128xf32, #tpu.memory_space<vmem>>, vector<128x128xf32>
    tpu.vector_store %arg4[%c0_5, %c0_6], %5 {strides = array<i32>} : memref<128x128xf32, #tpu.memory_space<vmem>>, vector<128x128xf32>,
    return
  }
  func.func @transform_0(%arg0: i32) -> (i32, i32) {
    %c0_i32 = arith.constant 0 : i32
    %c0_i32_0 = arith.constant 0 : i32
    return %arg0, %c0_i32 : i32, i32
  }
  func.func @transform_1(%arg0: i32) -> (i32, i32) {
    %c0_i32 = arith.constant 0 : i32
    %c0_i32_0 = arith.constant 0 : i32
    %c0_i32_1 = arith.constant 0 : i32
    return %c0_i32, %c0_i32_0 : i32, i32
  }
  func.func @transform_2(%arg0: i32) -> (i32, i32) {
    %c0_i32 = arith.constant 0 : i32
    %c0_i32_0 = arith.constant 0 : i32
    %c0_i32_1 = arith.constant 0 : i32
    return %c0_i32, %c0_i32_0 : i32, i32
  }
  func.func @transform_3(%arg0: i32) -> (i32, i32) {
    %c0_i32 = arith.constant 0 : i32
    %c0_i32_0 = arith.constant 0 : i32
    return %arg0, %c0_i32 : i32, i32
  }
}

</mosaic_0001>

<llo_original>
// kernel: mha_forward.5
$region0: #{mha_forward.5}
  #allocation0 [shape = 'u32[]', space=smem, size = 0x4, offset = 0x4, fixed_abs, tag = 'smem constant byte address 0x4 - core index']
  #allocation1 [shape = 'u32[144,128]{1,0:T(1,128)}', space=vmem, size = 0x12000, scoped, tag = 'internal scratch']
  %s0 = inlined_call_operand.hbm [shape: f32[256,128], index: 0, kind: input, shape index: {}]
  %s1 = inlined_call_operand.hbm [shape: f32[128,128], index: 1, kind: input, shape index: {}]
  %s2 = inlined_call_operand.vmem [shape: f32[1,128], index: 2, kind: input, shape index: {}]
  %s3 = inlined_call_operand.vmem [shape: f32[256,128], index: 3, kind: output, shape index: {}]
  %s4 = sld [smem:[#allocation0]]
  $region53: #{mha_forward.5} parent=0
    _
  %s6 = ssub.s32 1, %s4
  %s7 = scalar_select 0, %s6, %s4
  $region1: #{mha_forward.5} parent=0
    #allocation2 [shape = 'u8[131072]{0}', space=vmem, size = 0x20000, scoped, tag = 'input window, operand 0']
    #allocation3 [shape = 's32[2]{0}', space=sflag, size = 0x8, scoped, tag = 'scoped memory for mha_forward.5']
    #allocation4 [shape = 'u8[65536]{0}', space=vmem, size = 0x10000, scoped, tag = 'input window, operand 1, single buffered']
    #allocation5 [shape = 's32[1]{0}', space=sflag, size = 0x4, scoped, tag = 'scoped memory for mha_forward.5']
    %8 = vsyncpa [#allocation3], 0
    %s9 = scalar_lea.sflag [#allocation3], 1
    %10 = vsyncpa %s9, 0
    %11 = vsyncpa [#allocation5], 0
    loop: start=0, step=1, limit=4
    $region2: #{mha_forward.5} parent=1 // loop_pre_header
      _
    $region3: #{mha_forward.5} parent=1 // loop_header
      %s13 = sphi 0, %s17
      %p14 = scmp.ge.s32.totalorder %s13, 4
      %s23 = sphi 0, %s25
      %s26 = sphi 0, %s23
      %s27 = sphi 0, %s26
      %s43 = sphi 0, %s27
      %s47 = sphi 0, %s47
      %s49 = sphi 0, %s47
      %s50 = sphi 0, %s49
      %s64 = sphi 0, %s50
      %s68 = sphi 0, %s68
      %s70 = sphi 0, %s68
      %s71 = sphi 0, %s70
      %s85 = sphi 0, %s71
      %s91 = sphi 0, %s93
      %s94 = sphi 0, %s91
      %s95 = sphi 0, %s94
      %s111 = sphi 0, %s95
    $region4: #{mha_forward.5} parent=1 // loop_header_branch
      %16 = sbr.rel (%p14) target = $region8
    $region5: #{mha_forward.5} parent=1 // loop_body
      %s18 = ssub.s32 %s13, 1
      %s19 = ssub.s32 %s13, 2
      %s20 = sadd.s32 %s13, 1
      %s21 = ssub.s32 %s13, %s20
      %p22 = scmp.eq.s32.totalorder %s21, 0
      %s24 = sadd.s32 %s23, 1
      %s25 = scalar_select %p22, %s23, %s24
      %p28 = pneg %p22
      %p29 = scmp.eq.s32.totalorder %s13, 1
      %p30 = por %p28, %p29
      %p31 = scmp.ne.s32.totalorder %s23, %s26
      %p32 = scmp.eq.s32.totalorder %s13, 0
      %p33 = por %p31, %p32
      %p34 = scmp.ne.s32.totalorder %s23, %s26
      %p35 = scmp.eq.s32.totalorder %s18, 1
      %p36 = por %p34, %p35
      %p37 = scmp.ne.s32.totalorder %s26, %s27
      %p38 = scmp.eq.s32.totalorder %s18, 0
      %p39 = por %p37, %p38
      %p40 = scmp.ne.s32.totalorder %s26, %s27
      %p41 = scmp.eq.s32.totalorder %s19, 1
      %p42 = por %p40, %p41
      %p44 = scmp.ne.s32.totalorder %s27, %s43
      %p45 = scmp.eq.s32.totalorder %s19, 0
      %p46 = por %p44, %p45
      %s48 = sadd.s32 %s47, 1
      %p51 = scmp.eq.s32.totalorder %s13, 1
      %p52 = scmp.ne.s32.totalorder %s47, %s49
      %p53 = scmp.eq.s32.totalorder %s13, 0
      %p54 = por %p52, %p53
      %p55 = scmp.ne.s32.totalorder %s47, %s49
      %p56 = scmp.eq.s32.totalorder %s18, 1
      %p57 = por %p55, %p56
      %p58 = scmp.ne.s32.totalorder %s49, %s50
      %p59 = scmp.eq.s32.totalorder %s18, 0
      %p60 = por %p58, %p59
      %p61 = scmp.ne.s32.totalorder %s49, %s50
      %p62 = scmp.eq.s32.totalorder %s19, 1
      %p63 = por %p61, %p62
      %p65 = scmp.ne.s32.totalorder %s50, %s64
      %p66 = scmp.eq.s32.totalorder %s19, 0
      %p67 = por %p65, %p66
      %s69 = sadd.s32 %s68, 1
      %p72 = scmp.eq.s32.totalorder %s13, 1
      %p73 = scmp.ne.s32.totalorder %s68, %s70
      %p74 = scmp.eq.s32.totalorder %s13, 0
      %p75 = por %p73, %p74
      %p76 = scmp.ne.s32.totalorder %s68, %s70
      %p77 = scmp.eq.s32.totalorder %s18, 1
      %p78 = por %p76, %p77
      %p79 = scmp.ne.s32.totalorder %s70, %s71
      %p80 = scmp.eq.s32.totalorder %s18, 0
      %p81 = por %p79, %p80
      %p82 = scmp.ne.s32.totalorder %s70, %s71
      %p83 = scmp.eq.s32.totalorder %s19, 1
      %p84 = por %p82, %p83
      %p86 = scmp.ne.s32.totalorder %s71, %s85
      %p87 = scmp.eq.s32.totalorder %s19, 0
      %p88 = por %p86, %p87
      %s89 = ssub.s32 %s13, %s20
      %p90 = scmp.eq.s32.totalorder %s89, 0
      %s92 = sadd.s32 %s91, 1
      %s93 = scalar_select %p90, %s91, %s92
      %p96 = pneg %p90
      %p97 = scmp.eq.s32.totalorder %s13, 1
      %p98 = por %p96, %p97
      %p99 = scmp.ne.s32.totalorder %s91, %s94
      %p100 = scmp.eq.s32.totalorder %s13, 0
      %p101 = por %p99, %p100
      %p102 = scmp.ne.s32.totalorder %s91, %s94
      %p103 = scmp.eq.s32.totalorder %s18, 1
      %p104 = por %p102, %p103
      %p105 = scmp.ne.s32.totalorder %s94, %s95
      %p106 = scmp.eq.s32.totalorder %s18, 0
      %p107 = por %p105, %p106
      %p108 = scmp.ne.s32.totalorder %s94, %s95
      %p109 = scmp.eq.s32.totalorder %s19, 1
      %p110 = por %p108, %p109
      %p112 = scmp.ne.s32.totalorder %s95, %s111
      %p113 = scmp.eq.s32.totalorder %s19, 0
      %p114 = por %p112, %p113
      %p115 = scmp.le.s32.totalorder 1, %s13
      %p116 = scmp.lt.s32.totalorder %s13, 3
      %p117 = pnand %p115, %p116
      %p118 = pneg %p117
      // Predicated region
      $region9: #{mha_forward.5} parent=5 // pred_check
        _
      $region10: #{mha_forward.5} parent=5 // pred_check_branch
        %120 = sbr.rel (%p117) target = $region12
      $region11: #{mha_forward.5} parent=5 // pred_region
        %s121 = ssub.s32 %s13, 1
        // Predicated region
        $region13: #{mha_forward.5} parent=11 // pred_check
          %p122 = pneg %p60
        $region14: #{mha_forward.5} parent=11 // pred_check_branch
          %124 = sbr.rel (%p122) target = $region16
        $region15: #{mha_forward.5} parent=11 // pred_region
          %s126 = ssub.s32 2048, 2048
          %127 = vsyncadd [#allocation5], %s126
          %s128 = sshll.u32 [#allocation4], 4
          %s129 = int_to_ptr.vmem [resolvable:$true] %s128
          %134 = dma.hbm_to_vmem [thread:$0]  %s1, 2048, %s129, [#allocation5], 128, 128, 8
        $region16: #{mha_forward.5} parent=11 // pred_fallthru
          _
        // Predicated region
        $region17: #{mha_forward.5} parent=11 // pred_check
          %p135 = pneg %p81
        $region18: #{mha_forward.5} parent=11 // pred_check_branch
          %137 = sbr.rel (%p135) target = $region20
        $region19: #{mha_forward.5} parent=11 // pred_region
          _
        $region20: #{mha_forward.5} parent=11 // pred_fallthru
          _
      $region12: #{mha_forward.5} parent=5 // pred_fallthru
        _
      %p138 = scmp.lt.s32.totalorder %s13, 2
      // Predicated region
      $region21: #{mha_forward.5} parent=5 // pred_check
        %p139 = pneg %p138
      $region22: #{mha_forward.5} parent=5 // pred_check_branch
        %141 = sbr.rel (%p139) target = $region24
      $region23: #{mha_forward.5} parent=5 // pred_region
        // Predicated region
        $region25: #{mha_forward.5} parent=23 // pred_check
          %p142 = pneg %p33
        $region26: #{mha_forward.5} parent=23 // pred_check_branch
          %144 = sbr.rel (%p142) target = $region28
        $region27: #{mha_forward.5} parent=23 // pred_region
          %s145 = sand.u32 %s23, 1
          %s146 = scalar_lea.sflag [#allocation3], %s145
          %s147 = sand.u32 %s23, 1
          %s148 = smul.addr %s147, 128
          %s149 = scalar_lea.vmem [#allocation2], %s148
          %s150 = smul.u32 16, %s13
          %s152 = ssub.s32 2048, 2048
          %153 = vsyncadd %s146, %s152
          %s154 = smul.addr %s150, 128
          %s155 = scalar_lea.hbm %s0, %s154
          %s156 = sshll.u32 %s149, 4
          %s157 = int_to_ptr.vmem [resolvable:$true] %s156
          %162 = dma.hbm_to_vmem [thread:$0]  %s155, 2048, %s157, %s146, 128, 128, 8
        $region28: #{mha_forward.5} parent=23 // pred_fallthru
          _
      $region24: #{mha_forward.5} parent=5 // pred_fallthru
        _
      %p163 = scmp.le.s32.totalorder 1, %s13
      %p164 = scmp.lt.s32.totalorder %s13, 3
      %p165 = pnand %p163, %p164
      %p166 = pneg %p165
      // Predicated region
      $region29: #{mha_forward.5} parent=5 // pred_check
        _
      $region30: #{mha_forward.5} parent=5 // pred_check_branch
        %168 = sbr.rel (%p165) target = $region32
      $region31: #{mha_forward.5} parent=5 // pred_region
        %s169 = ssub.s32 %s13, 1
        %s170 = sand.u32 %s26, 1
        %s171 = scalar_lea.sflag [#allocation3], %s170
        %s172 = sand.u32 %s26, 1
        %s173 = smul.addr %s172, 128
        %s174 = scalar_lea.vmem [#allocation2], %s173
        // Predicated region
        $region33: #{mha_forward.5} parent=31 // pred_check
          %p175 = pneg %p39
        $region34: #{mha_forward.5} parent=31 // pred_check_branch
          %177 = sbr.rel (%p175) target = $region36
        $region35: #{mha_forward.5} parent=31 // pred_region
          %178 = dma.done %s171, 2048
        $region36: #{mha_forward.5} parent=31 // pred_fallthru
          _
        // Predicated region
        $region37: #{mha_forward.5} parent=31 // pred_check
          %p179 = pneg %p60
        $region38: #{mha_forward.5} parent=31 // pred_check_branch
          %181 = sbr.rel (%p179) target = $region40
        $region39: #{mha_forward.5} parent=31 // pred_region
          %182 = dma.done [#allocation5], 2048
        $region40: #{mha_forward.5} parent=31 // pred_fallthru
          _
        %s183 = sand.u32 %s26, 1
        %s184 = scalar_lea.sflag [#allocation3], %s183
        %s185 = sand.u32 %s26, 1
        %s186 = smul.addr %s185, 128
        %s187 = scalar_lea.vmem [#allocation2], %s186
        %p188 = pneg %p39
        %p189 = pneg %p36
        %p190 = pneg %p60
        %p191 = pneg %p57
        %p192 = pneg %p81
        %p193 = pneg %p78
        %p194 = pneg %p107
        %p195 = pneg %p104
        %s196 = smul.u32 16, %s18
        %p197 = scmp.lt.s32.totalorder %s196, 31
        %s198 = scalar_select %p197, %s196, 31
        %s199 = smul.addr %s198, 8
        %s200 = scalar_lea.vmem %s3, %s199
        %s201 = smul.u32 16, %s18
        %s202 = smul.u32 16, %s18
        %p203 = scmp.lt.s32.totalorder %s202, 31
        %s204 = scalar_select %p203, %s202, 31
        %s205 = smul.addr %s204, 8
        %s206 = scalar_lea.vmem %s3, %s205
        %s207 = smul.u32 16, %s18
        %v208 = vld [vmem:[%s174] sm:$0xff]
        %v209 = vld [vmem:[%s174 + $0x8] sm:$0xff]
        %v210 = vld [vmem:[%s174 + $0x10] sm:$0xff]
        %v211 = vld [vmem:[%s174 + $0x18] sm:$0xff]
        %v212 = vld [vmem:[%s174 + $0x20] sm:$0xff]
        %v213 = vld [vmem:[%s174 + $0x28] sm:$0xff]
        %v214 = vld [vmem:[%s174 + $0x30] sm:$0xff]
        %v215 = vld [vmem:[%s174 + $0x38] sm:$0xff]
        %v216 = vld [vmem:[%s174 + $0x40] sm:$0xff]
        %v217 = vld [vmem:[%s174 + $0x48] sm:$0xff]
        %v218 = vld [vmem:[%s174 + $0x50] sm:$0xff]
        %v219 = vld [vmem:[%s174 + $0x58] sm:$0xff]
        %v220 = vld [vmem:[%s174 + $0x60] sm:$0xff]
        %v221 = vld [vmem:[%s174 + $0x68] sm:$0xff]
        %v222 = vld [vmem:[%s174 + $0x70] sm:$0xff]
        %v223 = vld [vmem:[%s174 + $0x78] sm:$0xff]
        %v224 = vld [vmem:[#allocation4] sm:$0xff]
        %v225 = vld [vmem:[#allocation4 + $0x8] sm:$0xff]
        %v226 = vld [vmem:[#allocation4 + $0x10] sm:$0xff]
        %v227 = vld [vmem:[#allocation4 + $0x18] sm:$0xff]
        %v228 = vld [vmem:[#allocation4 + $0x20] sm:$0xff]
        %v229 = vld [vmem:[#allocation4 + $0x28] sm:$0xff]
        %v230 = vld [vmem:[#allocation4 + $0x30] sm:$0xff]
        %v231 = vld [vmem:[#allocation4 + $0x38] sm:$0xff]
        %v232 = vld [vmem:[#allocation4 + $0x40] sm:$0xff]
        %v233 = vld [vmem:[#allocation4 + $0x48] sm:$0xff]
        %v234 = vld [vmem:[#allocation4 + $0x50] sm:$0xff]
        %v235 = vld [vmem:[#allocation4 + $0x58] sm:$0xff]
        %v236 = vld [vmem:[#allocation4 + $0x60] sm:$0xff]
        %v237 = vld [vmem:[#allocation4 + $0x68] sm:$0xff]
        %v238 = vld [vmem:[#allocation4 + $0x70] sm:$0xff]
        %v239 = vld [vmem:[#allocation4 + $0x78] sm:$0xff]
        %v240 = vld [vmem:[%s2] sm:$0x1]
        %v242 = vlaneseq
        %v243 = vshrl.u32 %v242, 7
        %v244 = vsub.s32 0, %v243
        %v245 = vrot.slane %v240, %v244
        %247 = vmatprep.subr.mxu0 0.0
        %248 = vmatpush1.msra.mxu0 %v224
        %249 = vmatprep.subr.mxu0 0.0
        %250 = vmatpush1.msra.mxu0 %v225
        %251 = vmatprep.subr.mxu0 0.0
        %252 = vmatpush1.msra.mxu0 %v226
        %253 = vmatprep.subr.mxu0 0.0
        %254 = vmatpush1.msra.mxu0 %v227
        %255 = vmatprep.subr.mxu0 0.0
        %256 = vmatpush1.msra.mxu0 %v228
        %257 = vmatprep.subr.mxu0 0.0
        %258 = vmatpush1.msra.mxu0 %v229
        %259 = vmatprep.subr.mxu0 0.0
        %260 = vmatpush1.msra.mxu0 %v230
        %261 = vmatprep.subr.mxu0 0.0
        %262 = vmatpush1.msra.mxu0 %v231
        %263 = vmatprep.subr.mxu0 0.0
        %264 = vmatpush1.msra.mxu0 %v232
        %265 = vmatprep.subr.mxu0 0.0
        %266 = vmatpush1.msra.mxu0 %v233
        %267 = vmatprep.subr.mxu0 0.0
        %268 = vmatpush1.msra.mxu0 %v234
        %269 = vmatprep.subr.mxu0 0.0
        %270 = vmatpush1.msra.mxu0 %v235
        %271 = vmatprep.subr.mxu0 0.0
        %272 = vmatpush1.msra.mxu0 %v236
        %273 = vmatprep.subr.mxu0 0.0
        %274 = vmatpush1.msra.mxu0 %v237
        %275 = vmatprep.subr.mxu0 0.0
        %276 = vmatpush1.msra.mxu0 %v238
        %277 = vmatprep.subr.mxu0 0.0
        %278 = vmatpush1.msra.mxu0 %v239
        %279 = vmatprep.subr.mxu0 0.0
        %280 = vmatpush1.msra.mxu0 0.0
        %281 = vmatprep.subr.mxu0 0.0
        %282 = vmatpush1.msra.mxu0 0.0
        %283 = vmatprep.subr.mxu0 0.0
        %284 = vmatpush1.msra.mxu0 0.0
        %285 = vmatprep.subr.mxu0 0.0
        %286 = vmatpush1.msra.mxu0 0.0
        %287 = vmatprep.subr.mxu0 0.0
        %288 = vmatpush1.msra.mxu0 0.0
        %289 = vmatprep.subr.mxu0 0.0
        %290 = vmatpush1.msra.mxu0 0.0
        %291 = vmatprep.subr.mxu0 0.0
        %292 = vmatpush1.msra.mxu0 0.0
        %293 = vmatprep.subr.mxu0 0.0
        %294 = vmatpush1.msra.mxu0 0.0
        %295 = vmatprep.subr.mxu0 0.0
        %296 = vmatpush1.msra.mxu0 0.0
        %297 = vmatprep.subr.mxu0 0.0
        %298 = vmatpush1.msra.mxu0 0.0
        %299 = vmatprep.subr.mxu0 0.0
        %300 = vmatpush1.msra.mxu0 0.0
        %301 = vmatprep.subr.mxu0 0.0
        %302 = vmatpush1.msra.mxu0 0.0
        %303 = vmatprep.subr.mxu0 0.0
        %304 = vmatpush1.msra.mxu0 0.0
        %305 = vmatprep.subr.mxu0 0.0
        %306 = vmatpush1.msra.mxu0 0.0
        %307 = vmatprep.subr.mxu0 0.0
        %308 = vmatpush1.msra.mxu0 0.0
        %309 = vmatprep.subr.mxu0 0.0
        %310 = vmatpush1.msra.mxu0 0.0
        %311 = vmatprep.mubr.f32.mxu0 0.0
        %312 = vmatmul.mubr.f32.gmra.mrb[0].mxu0 %v208
        %v313 = vpop.f32.mrb[0].mxu0
        %v314 = vadd.f32 %v245, %v313
        %v315 = vpop.f32.mrb[0].mxu0
        %316 = vmatprep.mubr.f32.mxu0 0.0
        %317 = vmatmul.mubr.f32.gmra.mrb[0].mxu0 %v209
        %v318 = vpop.f32.mrb[0].mxu0
        %v319 = vadd.f32 %v245, %v318
        %v320 = vpop.f32.mrb[0].mxu0
        %321 = vmatprep.mubr.f32.mxu0 0.0
        %322 = vmatmul.mubr.f32.gmra.mrb[0].mxu0 %v210
        %v323 = vpop.f32.mrb[0].mxu0
        %v324 = vadd.f32 %v245, %v323
        %v325 = vpop.f32.mrb[0].mxu0
        %326 = vmatprep.mubr.f32.mxu0 0.0
        %327 = vmatmul.mubr.f32.gmra.mrb[0].mxu0 %v211
        %v328 = vpop.f32.mrb[0].mxu0
        %v329 = vadd.f32 %v245, %v328
        %v330 = vpop.f32.mrb[0].mxu0
        %331 = vmatprep.mubr.f32.mxu0 0.0
        %332 = vmatmul.mubr.f32.gmra.mrb[0].mxu0 %v212
        %v333 = vpop.f32.mrb[0].mxu0
        %v334 = vadd.f32 %v245, %v333
        %v335 = vpop.f32.mrb[0].mxu0
        %336 = vmatprep.mubr.f32.mxu0 0.0
        %337 = vmatmul.mubr.f32.gmra.mrb[0].mxu0 %v213
        %v338 = vpop.f32.mrb[0].mxu0
        %v339 = vadd.f32 %v245, %v338
        %v340 = vpop.f32.mrb[0].mxu0
        %341 = vmatprep.mubr.f32.mxu0 0.0
        %342 = vmatmul.mubr.f32.gmra.mrb[0].mxu0 %v214
        %v343 = vpop.f32.mrb[0].mxu0
        %v344 = vadd.f32 %v245, %v343
        %v345 = vpop.f32.mrb[0].mxu0
        %346 = vmatprep.mubr.f32.mxu0 0.0
        %347 = vmatmul.mubr.f32.gmra.mrb[0].mxu0 %v215
        %v348 = vpop.f32.mrb[0].mxu0
        %v349 = vadd.f32 %v245, %v348
        %v350 = vpop.f32.mrb[0].mxu0
        %351 = vmatprep.mubr.f32.mxu0 0.0
        %352 = vmatmul.mubr.f32.gmra.mrb[0].mxu0 %v216
        %v353 = vpop.f32.mrb[0].mxu0
        %v354 = vadd.f32 %v245, %v353
        %v355 = vpop.f32.mrb[0].mxu0
        %356 = vmatprep.mubr.f32.mxu0 0.0
        %357 = vmatmul.mubr.f32.gmra.mrb[0].mxu0 %v217
        %v358 = vpop.f32.mrb[0].mxu0
        %v359 = vadd.f32 %v245, %v358
        %v360 = vpop.f32.mrb[0].mxu0
        %361 = vmatprep.mubr.f32.mxu0 0.0
        %362 = vmatmul.mubr.f32.gmra.mrb[0].mxu0 %v218
        %v363 = vpop.f32.mrb[0].mxu0
        %v364 = vadd.f32 %v245, %v363
        %v365 = vpop.f32.mrb[0].mxu0
        %366 = vmatprep.mubr.f32.mxu0 0.0
        %367 = vmatmul.mubr.f32.gmra.mrb[0].mxu0 %v219
        %v368 = vpop.f32.mrb[0].mxu0
        %v369 = vadd.f32 %v245, %v368
        %v370 = vpop.f32.mrb[0].mxu0
        %371 = vmatprep.mubr.f32.mxu0 0.0
        %372 = vmatmul.mubr.f32.gmra.mrb[0].mxu0 %v220
        %v373 = vpop.f32.mrb[0].mxu0
        %v374 = vadd.f32 %v245, %v373
        %v375 = vpop.f32.mrb[0].mxu0
        %376 = vmatprep.mubr.f32.mxu0 0.0
        %377 = vmatmul.mubr.f32.gmra.mrb[0].mxu0 %v221
        %v378 = vpop.f32.mrb[0].mxu0
        %v379 = vadd.f32 %v245, %v378
        %v380 = vpop.f32.mrb[0].mxu0
        %381 = vmatprep.mubr.f32.mxu0 0.0
        %382 = vmatmul.mubr.f32.gmra.mrb[0].mxu0 %v222
        %v383 = vpop.f32.mrb[0].mxu0
        %v384 = vadd.f32 %v245, %v383
        %v385 = vpop.f32.mrb[0].mxu0
        %386 = vmatprep.mubr.f32.mxu0 0.0
        %387 = vmatmul.mubr.f32.gmra.mrb[0].mxu0 %v223
        %v388 = vpop.f32.mrb[0].mxu0
        %v389 = vadd.f32 %v245, %v388
        %v390 = vpop.f32.mrb[0].mxu0
        %391 = vdwg.mxu0
        %392 = vst [vmem:[%s206] sm:$0xff] %v314
        %393 = vst [vmem:[%s206 + $0x8] sm:$0xff] %v319
        %394 = vst [vmem:[%s206 + $0x10] sm:$0xff] %v324
        %395 = vst [vmem:[%s206 + $0x18] sm:$0xff] %v329
        %396 = vst [vmem:[%s206 + $0x20] sm:$0xff] %v334
        %397 = vst [vmem:[%s206 + $0x28] sm:$0xff] %v339
        %398 = vst [vmem:[%s206 + $0x30] sm:$0xff] %v344
        %399 = vst [vmem:[%s206 + $0x38] sm:$0xff] %v349
        %400 = vst [vmem:[%s206 + $0x40] sm:$0xff] %v354
        %401 = vst [vmem:[%s206 + $0x48] sm:$0xff] %v359
        %402 = vst [vmem:[%s206 + $0x50] sm:$0xff] %v364
        %403 = vst [vmem:[%s206 + $0x58] sm:$0xff] %v369
        %404 = vst [vmem:[%s206 + $0x60] sm:$0xff] %v374
        %405 = vst [vmem:[%s206 + $0x68] sm:$0xff] %v379
        %406 = vst [vmem:[%s206 + $0x70] sm:$0xff] %v384
        %407 = vst [vmem:[%s206 + $0x78] sm:$0xff] %v389
        %s408 = smul.u32 16, %s18
        %p409 = scmp.lt.s32.totalorder %s408, 31
        %s410 = scalar_select %p409, %s408, 31
        %s411 = smul.addr %s410, 8
        %s412 = scalar_lea.vmem %s3, %s411
        // Predicated region
        $region41: #{mha_forward.5} parent=31 // pred_check
          %p413 = pneg %p104
        $region42: #{mha_forward.5} parent=31 // pred_check_branch
          %415 = sbr.rel (%p413) target = $region44
        $region43: #{mha_forward.5} parent=31 // pred_region
          %s416 = smul.u32 16, %s18
        $region44: #{mha_forward.5} parent=31 // pred_fallthru
          _
      $region32: #{mha_forward.5} parent=5 // pred_fallthru
        _
      %p417 = scmp.le.s32.totalorder 2, %s13
      // Predicated region
      $region45: #{mha_forward.5} parent=5 // pred_check
        %p418 = pneg %p417
      $region46: #{mha_forward.5} parent=5 // pred_check_branch
        %420 = sbr.rel (%p418) target = $region48
      $region47: #{mha_forward.5} parent=5 // pred_region
        %s421 = ssub.s32 %s13, 2
        // Predicated region
        $region49: #{mha_forward.5} parent=47 // pred_check
          %p422 = pneg %p110
        $region50: #{mha_forward.5} parent=47 // pred_check_branch
          %424 = sbr.rel (%p422) target = $region52
        $region51: #{mha_forward.5} parent=47 // pred_region
          %s425 = smul.u32 16, %s19
          %p426 = scmp.lt.s32.totalorder %s425, 31
          %s427 = scalar_select %p426, %s425, 31
          %s428 = smul.addr %s427, 8
          %s429 = scalar_lea.vmem %s3, %s428
        $region52: #{mha_forward.5} parent=47 // pred_fallthru
          _
      $region48: #{mha_forward.5} parent=5 // pred_fallthru
        _
    $region6: #{mha_forward.5} parent=1 // loop_footer
      %s17 = sadd.s32 1, %s13
    $region7: #{mha_forward.5} parent=1 // loop_footer_branch
      %12 = sbr.rel target = $region3
    $region8: #{mha_forward.5} parent=1 // loop_exit
      _
    %430 = vsyncpa [#allocation3], 1
    %s431 = scalar_lea.sflag [#allocation3], 1
    %432 = vsyncpa %s431, 1
    %433 = vsyncpa [#allocation5], 1

// kernel: mha_forward.6
$region0: #{mha_forward.6}
  #allocation0 [shape = 'u32[]', space=smem, size = 0x4, offset = 0x4, fixed_abs, tag = 'smem constant byte address 0x4 - core index']
  #allocation1 [shape = 'u32[144,128]{1,0:T(1,128)}', space=vmem, size = 0x12000, scoped, tag = 'internal scratch']
  %s0 = inlined_call_operand.vmem [shape: f32[256,128], index: 0, kind: input, shape index: {}]
  %s1 = inlined_call_operand.vmem [shape: f32[128,128], index: 1, kind: input, shape index: {}]
  %s2 = inlined_call_operand.vmem [shape: f32[1,128], index: 2, kind: input, shape index: {}]
  %s3 = inlined_call_operand.vmem [shape: f32[256,128], index: 3, kind: output, shape index: {}]
  %s4 = sld [smem:[#allocation0]]
  $region45: #{mha_forward.6} parent=0
    _
  %s6 = ssub.s32 1, %s4
  %s7 = scalar_select 0, %s6, %s4
  loop: start=0, step=1, limit=4
  $region2: #{mha_forward.6} parent=0 // loop_pre_header
    _
  $region3: #{mha_forward.6} parent=0 // loop_header
    %s9 = sphi 0, %s13
    %p10 = scmp.ge.s32.totalorder %s9, 4
    %s19 = sphi 0, %s21
    %s22 = sphi 0, %s19
    %s23 = sphi 0, %s22
    %s39 = sphi 0, %s23
    %s43 = sphi 0, %s43
    %s45 = sphi 0, %s43
    %s46 = sphi 0, %s45
    %s60 = sphi 0, %s46
    %s64 = sphi 0, %s64
    %s66 = sphi 0, %s64
    %s67 = sphi 0, %s66
    %s81 = sphi 0, %s67
    %s87 = sphi 0, %s89
    %s90 = sphi 0, %s87
    %s91 = sphi 0, %s90
    %s107 = sphi 0, %s91
  $region4: #{mha_forward.6} parent=0 // loop_header_branch
    %12 = sbr.rel (%p10) target = $region8
  $region5: #{mha_forward.6} parent=0 // loop_body
    %s14 = ssub.s32 %s9, 1
    %s15 = ssub.s32 %s9, 2
    %s16 = sadd.s32 %s9, 1
    %s17 = ssub.s32 %s9, %s16
    %p18 = scmp.eq.s32.totalorder %s17, 0
    %s20 = sadd.s32 %s19, 1
    %s21 = scalar_select %p18, %s19, %s20
    %p24 = pneg %p18
    %p25 = scmp.eq.s32.totalorder %s9, 1
    %p26 = por %p24, %p25
    %p27 = scmp.ne.s32.totalorder %s19, %s22
    %p28 = scmp.eq.s32.totalorder %s9, 0
    %p29 = por %p27, %p28
    %p30 = scmp.ne.s32.totalorder %s19, %s22
    %p31 = scmp.eq.s32.totalorder %s14, 1
    %p32 = por %p30, %p31
    %p33 = scmp.ne.s32.totalorder %s22, %s23
    %p34 = scmp.eq.s32.totalorder %s14, 0
    %p35 = por %p33, %p34
    %p36 = scmp.ne.s32.totalorder %s22, %s23
    %p37 = scmp.eq.s32.totalorder %s15, 1
    %p38 = por %p36, %p37
    %p40 = scmp.ne.s32.totalorder %s23, %s39
    %p41 = scmp.eq.s32.totalorder %s15, 0
    %p42 = por %p40, %p41
    %s44 = sadd.s32 %s43, 1
    %p47 = scmp.eq.s32.totalorder %s9, 1
    %p48 = scmp.ne.s32.totalorder %s43, %s45
    %p49 = scmp.eq.s32.totalorder %s9, 0
    %p50 = por %p48, %p49
    %p51 = scmp.ne.s32.totalorder %s43, %s45
    %p52 = scmp.eq.s32.totalorder %s14, 1
    %p53 = por %p51, %p52
    %p54 = scmp.ne.s32.totalorder %s45, %s46
    %p55 = scmp.eq.s32.totalorder %s14, 0
    %p56 = por %p54, %p55
    %p57 = scmp.ne.s32.totalorder %s45, %s46
    %p58 = scmp.eq.s32.totalorder %s15, 1
    %p59 = por %p57, %p58
    %p61 = scmp.ne.s32.totalorder %s46, %s60
    %p62 = scmp.eq.s32.totalorder %s15, 0
    %p63 = por %p61, %p62
    %s65 = sadd.s32 %s64, 1
    %p68 = scmp.eq.s32.totalorder %s9, 1
    %p69 = scmp.ne.s32.totalorder %s64, %s66
    %p70 = scmp.eq.s32.totalorder %s9, 0
    %p71 = por %p69, %p70
    %p72 = scmp.ne.s32.totalorder %s64, %s66
    %p73 = scmp.eq.s32.totalorder %s14, 1
    %p74 = por %p72, %p73
    %p75 = scmp.ne.s32.totalorder %s66, %s67
    %p76 = scmp.eq.s32.totalorder %s14, 0
    %p77 = por %p75, %p76
    %p78 = scmp.ne.s32.totalorder %s66, %s67
    %p79 = scmp.eq.s32.totalorder %s15, 1
    %p80 = por %p78, %p79
    %p82 = scmp.ne.s32.totalorder %s67, %s81
    %p83 = scmp.eq.s32.totalorder %s15, 0
    %p84 = por %p82, %p83
    %s85 = ssub.s32 %s9, %s16
    %p86 = scmp.eq.s32.totalorder %s85, 0
    %s88 = sadd.s32 %s87, 1
    %s89 = scalar_select %p86, %s87, %s88
    %p92 = pneg %p86
    %p93 = scmp.eq.s32.totalorder %s9, 1
    %p94 = por %p92, %p93
    %p95 = scmp.ne.s32.totalorder %s87, %s90
    %p96 = scmp.eq.s32.totalorder %s9, 0
    %p97 = por %p95, %p96
    %p98 = scmp.ne.s32.totalorder %s87, %s90
    %p99 = scmp.eq.s32.totalorder %s14, 1
    %p100 = por %p98, %p99
    %p101 = scmp.ne.s32.totalorder %s90, %s91
    %p102 = scmp.eq.s32.totalorder %s14, 0
    %p103 = por %p101, %p102
    %p104 = scmp.ne.s32.totalorder %s90, %s91
    %p105 = scmp.eq.s32.totalorder %s15, 1
    %p106 = por %p104, %p105
    %p108 = scmp.ne.s32.totalorder %s91, %s107
    %p109 = scmp.eq.s32.totalorder %s15, 0
    %p110 = por %p108, %p109
    %p111 = scmp.le.s32.totalorder 1, %s9
    %p112 = scmp.lt.s32.totalorder %s9, 3
    %p113 = pnand %p111, %p112
    %p114 = pneg %p113
    // Predicated region
    $region9: #{mha_forward.6} parent=5 // pred_check
      _
    $region10: #{mha_forward.6} parent=5 // pred_check_branch
      %116 = sbr.rel (%p113) target = $region12
    $region11: #{mha_forward.6} parent=5 // pred_region
      %s117 = ssub.s32 %s9, 1
      // Predicated region
      $region13: #{mha_forward.6} parent=11 // pred_check
        %p118 = pneg %p56
      $region14: #{mha_forward.6} parent=11 // pred_check_branch
        %120 = sbr.rel (%p118) target = $region16
      $region15: #{mha_forward.6} parent=11 // pred_region
        _
      $region16: #{mha_forward.6} parent=11 // pred_fallthru
        _
      // Predicated region
      $region17: #{mha_forward.6} parent=11 // pred_check
        %p121 = pneg %p77
      $region18: #{mha_forward.6} parent=11 // pred_check_branch
        %123 = sbr.rel (%p121) target = $region20
      $region19: #{mha_forward.6} parent=11 // pred_region
        _
      $region20: #{mha_forward.6} parent=11 // pred_fallthru
        _
    $region12: #{mha_forward.6} parent=5 // pred_fallthru
      _
    %p124 = scmp.lt.s32.totalorder %s9, 2
    // Predicated region
    $region21: #{mha_forward.6} parent=5 // pred_check
      %p125 = pneg %p124
    $region22: #{mha_forward.6} parent=5 // pred_check_branch
      %127 = sbr.rel (%p125) target = $region24
    $region23: #{mha_forward.6} parent=5 // pred_region
      // Predicated region
      $region25: #{mha_forward.6} parent=23 // pred_check
        %p128 = pneg %p29
      $region26: #{mha_forward.6} parent=23 // pred_check_branch
        %130 = sbr.rel (%p128) target = $region28
      $region27: #{mha_forward.6} parent=23 // pred_region
        %s131 = smul.u32 16, %s9
        %p132 = scmp.lt.s32.totalorder %s131, 31
        %s133 = scalar_select %p132, %s131, 31
        %s134 = smul.addr %s133, 8
        %s135 = scalar_lea.vmem %s0, %s134
        %s136 = smul.u32 16, %s9
      $region28: #{mha_forward.6} parent=23 // pred_fallthru
        _
    $region24: #{mha_forward.6} parent=5 // pred_fallthru
      _
    %p137 = scmp.le.s32.totalorder 1, %s9
    %p138 = scmp.lt.s32.totalorder %s9, 3
    %p139 = pnand %p137, %p138
    %p140 = pneg %p139
    // Predicated region
    $region29: #{mha_forward.6} parent=5 // pred_check
      _
    $region30: #{mha_forward.6} parent=5 // pred_check_branch
      %142 = sbr.rel (%p139) target = $region32
    $region31: #{mha_forward.6} parent=5 // pred_region
      %s143 = ssub.s32 %s9, 1
      %s144 = smul.u32 16, %s14
      %p145 = scmp.lt.s32.totalorder %s144, 31
      %s146 = scalar_select %p145, %s144, 31
      %s147 = smul.addr %s146, 8
      %s148 = scalar_lea.vmem %s0, %s147
      %p149 = pneg %p35
      %p150 = pneg %p32
      %p151 = pneg %p56
      %p152 = pneg %p53
      %p153 = pneg %p77
      %p154 = pneg %p74
      %p155 = pneg %p103
      %p156 = pneg %p100
      %s157 = smul.u32 16, %s14
      %p158 = scmp.lt.s32.totalorder %s157, 31
      %s159 = scalar_select %p158, %s157, 31
      %s160 = smul.addr %s159, 8
      %s161 = scalar_lea.vmem %s3, %s160
      %s162 = smul.u32 16, %s14
      %p163 = scmp.lt.s32.totalorder %s162, 31
      %s164 = scalar_select %p163, %s162, 31
      %s165 = smul.addr %s164, 8
      %s166 = scalar_lea.vmem %s0, %s165
      %s167 = smul.u32 16, %s14
      %s168 = smul.u32 16, %s14
      %p169 = scmp.lt.s32.totalorder %s168, 31
      %s170 = scalar_select %p169, %s168, 31
      %s171 = smul.addr %s170, 8
      %s172 = scalar_lea.vmem %s3, %s171
      %s173 = smul.u32 16, %s14
      %v174 = vld [vmem:[%s166] sm:$0xff]
      %v175 = vld [vmem:[%s166 + $0x8] sm:$0xff]
      %v176 = vld [vmem:[%s166 + $0x10] sm:$0xff]
      %v177 = vld [vmem:[%s166 + $0x18] sm:$0xff]
      %v178 = vld [vmem:[%s166 + $0x20] sm:$0xff]
      %v179 = vld [vmem:[%s166 + $0x28] sm:$0xff]
      %v180 = vld [vmem:[%s166 + $0x30] sm:$0xff]
      %v181 = vld [vmem:[%s166 + $0x38] sm:$0xff]
      %v182 = vld [vmem:[%s166 + $0x40] sm:$0xff]
      %v183 = vld [vmem:[%s166 + $0x48] sm:$0xff]
      %v184 = vld [vmem:[%s166 + $0x50] sm:$0xff]
      %v185 = vld [vmem:[%s166 + $0x58] sm:$0xff]
      %v186 = vld [vmem:[%s166 + $0x60] sm:$0xff]
      %v187 = vld [vmem:[%s166 + $0x68] sm:$0xff]
      %v188 = vld [vmem:[%s166 + $0x70] sm:$0xff]
      %v189 = vld [vmem:[%s166 + $0x78] sm:$0xff]
      %v190 = vld [vmem:[%s1] sm:$0xff]
      %v191 = vld [vmem:[%s1 + $0x8] sm:$0xff]
      %v192 = vld [vmem:[%s1 + $0x10] sm:$0xff]
      %v193 = vld [vmem:[%s1 + $0x18] sm:$0xff]
      %v194 = vld [vmem:[%s1 + $0x20] sm:$0xff]
      %v195 = vld [vmem:[%s1 + $0x28] sm:$0xff]
      %v196 = vld [vmem:[%s1 + $0x30] sm:$0xff]
      %v197 = vld [vmem:[%s1 + $0x38] sm:$0xff]
      %v198 = vld [vmem:[%s1 + $0x40] sm:$0xff]
      %v199 = vld [vmem:[%s1 + $0x48] sm:$0xff]
      %v200 = vld [vmem:[%s1 + $0x50] sm:$0xff]
      %v201 = vld [vmem:[%s1 + $0x58] sm:$0xff]
      %v202 = vld [vmem:[%s1 + $0x60] sm:$0xff]
      %v203 = vld [vmem:[%s1 + $0x68] sm:$0xff]
      %v204 = vld [vmem:[%s1 + $0x70] sm:$0xff]
      %v205 = vld [vmem:[%s1 + $0x78] sm:$0xff]
      %v206 = vld [vmem:[%s2] sm:$0x1]
      %v208 = vlaneseq
      %v209 = vshrl.u32 %v208, 7
      %v210 = vsub.s32 0, %v209
      %v211 = vrot.slane %v206, %v210
      %213 = vmatprep.subr.mxu0 0.0
      %214 = vmatpush1.msra.mxu0 %v190
      %215 = vmatprep.subr.mxu0 0.0
      %216 = vmatpush1.msra.mxu0 %v191
      %217 = vmatprep.subr.mxu0 0.0
      %218 = vmatpush1.msra.mxu0 %v192
      %219 = vmatprep.subr.mxu0 0.0
      %220 = vmatpush1.msra.mxu0 %v193
      %221 = vmatprep.subr.mxu0 0.0
      %222 = vmatpush1.msra.mxu0 %v194
      %223 = vmatprep.subr.mxu0 0.0
      %224 = vmatpush1.msra.mxu0 %v195
      %225 = vmatprep.subr.mxu0 0.0
      %226 = vmatpush1.msra.mxu0 %v196
      %227 = vmatprep.subr.mxu0 0.0
      %228 = vmatpush1.msra.mxu0 %v197
      %229 = vmatprep.subr.mxu0 0.0
      %230 = vmatpush1.msra.mxu0 %v198
      %231 = vmatprep.subr.mxu0 0.0
      %232 = vmatpush1.msra.mxu0 %v199
      %233 = vmatprep.subr.mxu0 0.0
      %234 = vmatpush1.msra.mxu0 %v200
      %235 = vmatprep.subr.mxu0 0.0
      %236 = vmatpush1.msra.mxu0 %v201
      %237 = vmatprep.subr.mxu0 0.0
      %238 = vmatpush1.msra.mxu0 %v202
      %239 = vmatprep.subr.mxu0 0.0
      %240 = vmatpush1.msra.mxu0 %v203
      %241 = vmatprep.subr.mxu0 0.0
      %242 = vmatpush1.msra.mxu0 %v204
      %243 = vmatprep.subr.mxu0 0.0
      %244 = vmatpush1.msra.mxu0 %v205
      %245 = vmatprep.subr.mxu0 0.0
      %246 = vmatpush1.msra.mxu0 0.0
      %247 = vmatprep.subr.mxu0 0.0
      %248 = vmatpush1.msra.mxu0 0.0
      %249 = vmatprep.subr.mxu0 0.0
      %250 = vmatpush1.msra.mxu0 0.0
      %251 = vmatprep.subr.mxu0 0.0
      %252 = vmatpush1.msra.mxu0 0.0
      %253 = vmatprep.subr.mxu0 0.0
      %254 = vmatpush1.msra.mxu0 0.0
      %255 = vmatprep.subr.mxu0 0.0
      %256 = vmatpush1.msra.mxu0 0.0
      %257 = vmatprep.subr.mxu0 0.0
      %258 = vmatpush1.msra.mxu0 0.0
      %259 = vmatprep.subr.mxu0 0.0
      %260 = vmatpush1.msra.mxu0 0.0
      %261 = vmatprep.subr.mxu0 0.0
      %262 = vmatpush1.msra.mxu0 0.0
      %263 = vmatprep.subr.mxu0 0.0
      %264 = vmatpush1.msra.mxu0 0.0
      %265 = vmatprep.subr.mxu0 0.0
      %266 = vmatpush1.msra.mxu0 0.0
      %267 = vmatprep.subr.mxu0 0.0
      %268 = vmatpush1.msra.mxu0 0.0
      %269 = vmatprep.subr.mxu0 0.0
      %270 = vmatpush1.msra.mxu0 0.0
      %271 = vmatprep.subr.mxu0 0.0
      %272 = vmatpush1.msra.mxu0 0.0
      %273 = vmatprep.subr.mxu0 0.0
      %274 = vmatpush1.msra.mxu0 0.0
      %275 = vmatprep.subr.mxu0 0.0
      %276 = vmatpush1.msra.mxu0 0.0
      %277 = vmatprep.mubr.f32.mxu0 0.0
      %278 = vmatmul.mubr.f32.gmra.mrb[0].mxu0 %v174
      %v279 = vpop.f32.mrb[0].mxu0
      %v280 = vadd.f32 %v211, %v279
      %v281 = vpop.f32.mrb[0].mxu0
      %282 = vmatprep.mubr.f32.mxu0 0.0
      %283 = vmatmul.mubr.f32.gmra.mrb[0].mxu0 %v175
      %v284 = vpop.f32.mrb[0].mxu0
      %v285 = vadd.f32 %v211, %v284
      %v286 = vpop.f32.mrb[0].mxu0
      %287 = vmatprep.mubr.f32.mxu0 0.0
      %288 = vmatmul.mubr.f32.gmra.mrb[0].mxu0 %v176
      %v289 = vpop.f32.mrb[0].mxu0
      %v290 = vadd.f32 %v211, %v289
      %v291 = vpop.f32.mrb[0].mxu0
      %292 = vmatprep.mubr.f32.mxu0 0.0
      %293 = vmatmul.mubr.f32.gmra.mrb[0].mxu0 %v177
      %v294 = vpop.f32.mrb[0].mxu0
      %v295 = vadd.f32 %v211, %v294
      %v296 = vpop.f32.mrb[0].mxu0
      %297 = vmatprep.mubr.f32.mxu0 0.0
      %298 = vmatmul.mubr.f32.gmra.mrb[0].mxu0 %v178
      %v299 = vpop.f32.mrb[0].mxu0
      %v300 = vadd.f32 %v211, %v299
      %v301 = vpop.f32.mrb[0].mxu0
      %302 = vmatprep.mubr.f32.mxu0 0.0
      %303 = vmatmul.mubr.f32.gmra.mrb[0].mxu0 %v179
      %v304 = vpop.f32.mrb[0].mxu0
      %v305 = vadd.f32 %v211, %v304
      %v306 = vpop.f32.mrb[0].mxu0
      %307 = vmatprep.mubr.f32.mxu0 0.0
      %308 = vmatmul.mubr.f32.gmra.mrb[0].mxu0 %v180
      %v309 = vpop.f32.mrb[0].mxu0
      %v310 = vadd.f32 %v211, %v309
      %v311 = vpop.f32.mrb[0].mxu0
      %312 = vmatprep.mubr.f32.mxu0 0.0
      %313 = vmatmul.mubr.f32.gmra.mrb[0].mxu0 %v181
      %v314 = vpop.f32.mrb[0].mxu0
      %v315 = vadd.f32 %v211, %v314
      %v316 = vpop.f32.mrb[0].mxu0
      %317 = vmatprep.mubr.f32.mxu0 0.0
      %318 = vmatmul.mubr.f32.gmra.mrb[0].mxu0 %v182
      %v319 = vpop.f32.mrb[0].mxu0
      %v320 = vadd.f32 %v211, %v319
      %v321 = vpop.f32.mrb[0].mxu0
      %322 = vmatprep.mubr.f32.mxu0 0.0
      %323 = vmatmul.mubr.f32.gmra.mrb[0].mxu0 %v183
      %v324 = vpop.f32.mrb[0].mxu0
      %v325 = vadd.f32 %v211, %v324
      %v326 = vpop.f32.mrb[0].mxu0
      %327 = vmatprep.mubr.f32.mxu0 0.0
      %328 = vmatmul.mubr.f32.gmra.mrb[0].mxu0 %v184
      %v329 = vpop.f32.mrb[0].mxu0
      %v330 = vadd.f32 %v211, %v329
      %v331 = vpop.f32.mrb[0].mxu0
      %332 = vmatprep.mubr.f32.mxu0 0.0
      %333 = vmatmul.mubr.f32.gmra.mrb[0].mxu0 %v185
      %v334 = vpop.f32.mrb[0].mxu0
      %v335 = vadd.f32 %v211, %v334
      %v336 = vpop.f32.mrb[0].mxu0
      %337 = vmatprep.mubr.f32.mxu0 0.0
      %338 = vmatmul.mubr.f32.gmra.mrb[0].mxu0 %v186
      %v339 = vpop.f32.mrb[0].mxu0
      %v340 = vadd.f32 %v211, %v339
      %v341 = vpop.f32.mrb[0].mxu0
      %342 = vmatprep.mubr.f32.mxu0 0.0
      %343 = vmatmul.mubr.f32.gmra.mrb[0].mxu0 %v187
      %v344 = vpop.f32.mrb[0].mxu0
      %v345 = vadd.f32 %v211, %v344
      %v346 = vpop.f32.mrb[0].mxu0
      %347 = vmatprep.mubr.f32.mxu0 0.0
      %348 = vmatmul.mubr.f32.gmra.mrb[0].mxu0 %v188
      %v349 = vpop.f32.mrb[0].mxu0
      %v350 = vadd.f32 %v211, %v349
      %v351 = vpop.f32.mrb[0].mxu0
      %352 = vmatprep.mubr.f32.mxu0 0.0
      %353 = vmatmul.mubr.f32.gmra.mrb[0].mxu0 %v189
      %v354 = vpop.f32.mrb[0].mxu0
      %v355 = vadd.f32 %v211, %v354
      %v356 = vpop.f32.mrb[0].mxu0
      %357 = vdwg.mxu0
      %358 = vst [vmem:[%s172] sm:$0xff] %v280
      %359 = vst [vmem:[%s172 + $0x8] sm:$0xff] %v285
      %360 = vst [vmem:[%s172 + $0x10] sm:$0xff] %v290
      %361 = vst [vmem:[%s172 + $0x18] sm:$0xff] %v295
      %362 = vst [vmem:[%s172 + $0x20] sm:$0xff] %v300
      %363 = vst [vmem:[%s172 + $0x28] sm:$0xff] %v305
      %364 = vst [vmem:[%s172 + $0x30] sm:$0xff] %v310
      %365 = vst [vmem:[%s172 + $0x38] sm:$0xff] %v315
      %366 = vst [vmem:[%s172 + $0x40] sm:$0xff] %v320
      %367 = vst [vmem:[%s172 + $0x48] sm:$0xff] %v325
      %368 = vst [vmem:[%s172 + $0x50] sm:$0xff] %v330
      %369 = vst [vmem:[%s172 + $0x58] sm:$0xff] %v335
      %370 = vst [vmem:[%s172 + $0x60] sm:$0xff] %v340
      %371 = vst [vmem:[%s172 + $0x68] sm:$0xff] %v345
      %372 = vst [vmem:[%s172 + $0x70] sm:$0xff] %v350
      %373 = vst [vmem:[%s172 + $0x78] sm:$0xff] %v355
      %s374 = smul.u32 16, %s14
      %p375 = scmp.lt.s32.totalorder %s374, 31
      %s376 = scalar_select %p375, %s374, 31
      %s377 = smul.addr %s376, 8
      %s378 = scalar_lea.vmem %s3, %s377
      // Predicated region
      $region33: #{mha_forward.6} parent=31 // pred_check
        %p379 = pneg %p100
      $region34: #{mha_forward.6} parent=31 // pred_check_branch
        %381 = sbr.rel (%p379) target = $region36
      $region35: #{mha_forward.6} parent=31 // pred_region
        %s382 = smul.u32 16, %s14
      $region36: #{mha_forward.6} parent=31 // pred_fallthru
        _
    $region32: #{mha_forward.6} parent=5 // pred_fallthru
      _
    %p383 = scmp.le.s32.totalorder 2, %s9
    // Predicated region
    $region37: #{mha_forward.6} parent=5 // pred_check
      %p384 = pneg %p383
    $region38: #{mha_forward.6} parent=5 // pred_check_branch
      %386 = sbr.rel (%p384) target = $region40
    $region39: #{mha_forward.6} parent=5 // pred_region
      %s387 = ssub.s32 %s9, 2
      // Predicated region
      $region41: #{mha_forward.6} parent=39 // pred_check
        %p388 = pneg %p106
      $region42: #{mha_forward.6} parent=39 // pred_check_branch
        %390 = sbr.rel (%p388) target = $region44
      $region43: #{mha_forward.6} parent=39 // pred_region
        %s391 = smul.u32 16, %s15
        %p392 = scmp.lt.s32.totalorder %s391, 31
        %s393 = scalar_select %p392, %s391, 31
        %s394 = smul.addr %s393, 8
        %s395 = scalar_lea.vmem %s3, %s394
      $region44: #{mha_forward.6} parent=39 // pred_fallthru
        _
    $region40: #{mha_forward.6} parent=5 // pred_fallthru
      _
  $region6: #{mha_forward.6} parent=0 // loop_footer
    %s13 = sadd.s32 1, %s9
  $region7: #{mha_forward.6} parent=0 // loop_footer_branch
    %8 = sbr.rel target = $region3
  $region8: #{mha_forward.6} parent=0 // loop_exit
    _

// kernel: mha_forward.8
$region0: #{mha_forward.8}
  #allocation0 [shape = 'u32[]', space=smem, size = 0x4, offset = 0x4, fixed_abs, tag = 'smem constant byte address 0x4 - core index']
  #allocation1 [shape = 'u32[144,128]{1,0:T(1,128)}', space=vmem, size = 0x12000, scoped, tag = 'internal scratch']
  %s0 = inlined_call_operand.vmem [shape: f32[4,128,64], index: 0, kind: input, shape index: {}]
  %s1 = inlined_call_operand.vmem [shape: f32[4,128,64], index: 1, kind: input, shape index: {}]
  %s2 = inlined_call_operand.vmem [shape: f32[4,128,64], index: 2, kind: input, shape index: {}]
  %s3 = inlined_call_operand.vmem [shape: f32[128,128], index: 3, kind: input, shape index: {}]
  %s4 = inlined_call_operand.vmem [shape: f32[4,128,64], index: 4, kind: output, shape index: {0}]
  %s5 = inlined_call_operand.vmem [shape: f32[4,128,128], index: 5, kind: output, shape index: {1}]
  %6 = xla_tuple %s4, %s5
  %s7 = sld [smem:[#allocation0]]
  $region57: #{mha_forward.8} parent=0
    _
  %s9 = ssub.s32 1, %s7
  %s10 = scalar_select 0, %s9, %s7
  loop: start=0, step=1, limit=6
  $region2: #{mha_forward.8} parent=0 // loop_pre_header
    _
  $region3: #{mha_forward.8} parent=0 // loop_header
    %s12 = sphi 0, %s16
    %p13 = scmp.ge.s32.totalorder %s12, 6
    %s22 = sphi 0, %s24
    %s25 = sphi 0, %s22
    %s26 = sphi 0, %s25
    %s42 = sphi 0, %s26
    %s48 = sphi 0, %s50
    %s51 = sphi 0, %s48
    %s52 = sphi 0, %s51
    %s68 = sphi 0, %s52
    %s74 = sphi 0, %s76
    %s77 = sphi 0, %s74
    %s78 = sphi 0, %s77
    %s94 = sphi 0, %s78
    %s98 = sphi 0, %s98
    %s100 = sphi 0, %s98
    %s101 = sphi 0, %s100
    %s115 = sphi 0, %s101
    %s121 = sphi 0, %s123
    %s124 = sphi 0, %s121
    %s125 = sphi 0, %s124
    %s141 = sphi 0, %s125
    %s147 = sphi 0, %s149
    %s150 = sphi 0, %s147
    %s151 = sphi 0, %s150
    %s167 = sphi 0, %s151
  $region4: #{mha_forward.8} parent=0 // loop_header_branch
    %15 = sbr.rel (%p13) target = $region8
  $region5: #{mha_forward.8} parent=0 // loop_body
    %s17 = ssub.s32 %s12, 1
    %s18 = ssub.s32 %s12, 2
    %s19 = sadd.s32 %s12, 1
    %s20 = ssub.s32 %s12, %s19
    %p21 = scmp.eq.s32.totalorder %s20, 0
    %s23 = sadd.s32 %s22, 1
    %s24 = scalar_select %p21, %s22, %s23
    %p27 = pneg %p21
    %p28 = scmp.eq.s32.totalorder %s12, 3
    %p29 = por %p27, %p28
    %p30 = scmp.ne.s32.totalorder %s22, %s25
    %p31 = scmp.eq.s32.totalorder %s12, 0
    %p32 = por %p30, %p31
    %p33 = scmp.ne.s32.totalorder %s22, %s25
    %p34 = scmp.eq.s32.totalorder %s17, 3
    %p35 = por %p33, %p34
    %p36 = scmp.ne.s32.totalorder %s25, %s26
    %p37 = scmp.eq.s32.totalorder %s17, 0
    %p38 = por %p36, %p37
    %p39 = scmp.ne.s32.totalorder %s25, %s26
    %p40 = scmp.eq.s32.totalorder %s18, 3
    %p41 = por %p39, %p40
    %p43 = scmp.ne.s32.totalorder %s26, %s42
    %p44 = scmp.eq.s32.totalorder %s18, 0
    %p45 = por %p43, %p44
    %s46 = ssub.s32 %s12, %s19
    %p47 = scmp.eq.s32.totalorder %s46, 0
    %s49 = sadd.s32 %s48, 1
    %s50 = scalar_select %p47, %s48, %s49
    %p53 = pneg %p47
    %p54 = scmp.eq.s32.totalorder %s12, 3
    %p55 = por %p53, %p54
    %p56 = scmp.ne.s32.totalorder %s48, %s51
    %p57 = scmp.eq.s32.totalorder %s12, 0
    %p58 = por %p56, %p57
    %p59 = scmp.ne.s32.totalorder %s48, %s51
    %p60 = scmp.eq.s32.totalorder %s17, 3
    %p61 = por %p59, %p60
    %p62 = scmp.ne.s32.totalorder %s51, %s52
    %p63 = scmp.eq.s32.totalorder %s17, 0
    %p64 = por %p62, %p63
    %p65 = scmp.ne.s32.totalorder %s51, %s52
    %p66 = scmp.eq.s32.totalorder %s18, 3
    %p67 = por %p65, %p66
    %p69 = scmp.ne.s32.totalorder %s52, %s68
    %p70 = scmp.eq.s32.totalorder %s18, 0
    %p71 = por %p69, %p70
    %s72 = ssub.s32 %s12, %s19
    %p73 = scmp.eq.s32.totalorder %s72, 0
    %s75 = sadd.s32 %s74, 1
    %s76 = scalar_select %p73, %s74, %s75
    %p79 = pneg %p73
    %p80 = scmp.eq.s32.totalorder %s12, 3
    %p81 = por %p79, %p80
    %p82 = scmp.ne.s32.totalorder %s74, %s77
    %p83 = scmp.eq.s32.totalorder %s12, 0
    %p84 = por %p82, %p83
    %p85 = scmp.ne.s32.totalorder %s74, %s77
    %p86 = scmp.eq.s32.totalorder %s17, 3
    %p87 = por %p85, %p86
    %p88 = scmp.ne.s32.totalorder %s77, %s78
    %p89 = scmp.eq.s32.totalorder %s17, 0
    %p90 = por %p88, %p89
    %p91 = scmp.ne.s32.totalorder %s77, %s78
    %p92 = scmp.eq.s32.totalorder %s18, 3
    %p93 = por %p91, %p92
    %p95 = scmp.ne.s32.totalorder %s78, %s94
    %p96 = scmp.eq.s32.totalorder %s18, 0
    %p97 = por %p95, %p96
    %s99 = sadd.s32 %s98, 1
    %p102 = scmp.eq.s32.totalorder %s12, 3
    %p103 = scmp.ne.s32.totalorder %s98, %s100
    %p104 = scmp.eq.s32.totalorder %s12, 0
    %p105 = por %p103, %p104
    %p106 = scmp.ne.s32.totalorder %s98, %s100
    %p107 = scmp.eq.s32.totalorder %s17, 3
    %p108 = por %p106, %p107
    %p109 = scmp.ne.s32.totalorder %s100, %s101
    %p110 = scmp.eq.s32.totalorder %s17, 0
    %p111 = por %p109, %p110
    %p112 = scmp.ne.s32.totalorder %s100, %s101
    %p113 = scmp.eq.s32.totalorder %s18, 3
    %p114 = por %p112, %p113
    %p116 = scmp.ne.s32.totalorder %s101, %s115
    %p117 = scmp.eq.s32.totalorder %s18, 0
    %p118 = por %p116, %p117
    %s119 = ssub.s32 %s12, %s19
    %p120 = scmp.eq.s32.totalorder %s119, 0
    %s122 = sadd.s32 %s121, 1
    %s123 = scalar_select %p120, %s121, %s122
    %p126 = pneg %p120
    %p127 = scmp.eq.s32.totalorder %s12, 3
    %p128 = por %p126, %p127
    %p129 = scmp.ne.s32.totalorder %s121, %s124
    %p130 = scmp.eq.s32.totalorder %s12, 0
    %p131 = por %p129, %p130
    %p132 = scmp.ne.s32.totalorder %s121, %s124
    %p133 = scmp.eq.s32.totalorder %s17, 3
    %p134 = por %p132, %p133
    %p135 = scmp.ne.s32.totalorder %s124, %s125
    %p136 = scmp.eq.s32.totalorder %s17, 0
    %p137 = por %p135, %p136
    %p138 = scmp.ne.s32.totalorder %s124, %s125
    %p139 = scmp.eq.s32.totalorder %s18, 3
    %p140 = por %p138, %p139
    %p142 = scmp.ne.s32.totalorder %s125, %s141
    %p143 = scmp.eq.s32.totalorder %s18, 0
    %p144 = por %p142, %p143
    %s145 = ssub.s32 %s12, %s19
    %p146 = scmp.eq.s32.totalorder %s145, 0
    %s148 = sadd.s32 %s147, 1
    %s149 = scalar_select %p146, %s147, %s148
    %p152 = pneg %p146
    %p153 = scmp.eq.s32.totalorder %s12, 3
    %p154 = por %p152, %p153
    %p155 = scmp.ne.s32.totalorder %s147, %s150
    %p156 = scmp.eq.s32.totalorder %s12, 0
    %p157 = por %p155, %p156
    %p158 = scmp.ne.s32.totalorder %s147, %s150
    %p159 = scmp.eq.s32.totalorder %s17, 3
    %p160 = por %p158, %p159
    %p161 = scmp.ne.s32.totalorder %s150, %s151
    %p162 = scmp.eq.s32.totalorder %s17, 0
    %p163 = por %p161, %p162
    %p164 = scmp.ne.s32.totalorder %s150, %s151
    %p165 = scmp.eq.s32.totalorder %s18, 3
    %p166 = por %p164, %p165
    %p168 = scmp.ne.s32.totalorder %s151, %s167
    %p169 = scmp.eq.s32.totalorder %s18, 0
    %p170 = por %p168, %p169
    %p171 = scmp.le.s32.totalorder 1, %s12
    %p172 = scmp.lt.s32.totalorder %s12, 5
    %p173 = pnand %p171, %p172
    %p174 = pneg %p173
    // Predicated region
    $region9: #{mha_forward.8} parent=5 // pred_check
      _
    $region10: #{mha_forward.8} parent=5 // pred_check_branch
      %176 = sbr.rel (%p173) target = $region12
    $region11: #{mha_forward.8} parent=5 // pred_region
      %s177 = ssub.s32 %s12, 1
      // Predicated region
      $region13: #{mha_forward.8} parent=11 // pred_check
        %p178 = pneg %p111
      $region14: #{mha_forward.8} parent=11 // pred_check_branch
        %180 = sbr.rel (%p178) target = $region16
      $region15: #{mha_forward.8} parent=11 // pred_region
        _
      $region16: #{mha_forward.8} parent=11 // pred_fallthru
        _
    $region12: #{mha_forward.8} parent=5 // pred_fallthru
      _
    %p181 = scmp.lt.s32.totalorder %s12, 4
    // Predicated region
    $region17: #{mha_forward.8} parent=5 // pred_check
      %p182 = pneg %p181
    $region18: #{mha_forward.8} parent=5 // pred_check_branch
      %184 = sbr.rel (%p182) target = $region20
    $region19: #{mha_forward.8} parent=5 // pred_region
      // Predicated region
      $region21: #{mha_forward.8} parent=19 // pred_check
        %p185 = pneg %p32
      $region22: #{mha_forward.8} parent=19 // pred_check_branch
        %187 = sbr.rel (%p185) target = $region24
      $region23: #{mha_forward.8} parent=19 // pred_region
        %p188 = scmp.lt.s32.totalorder %s12, 3
        %s189 = scalar_select %p188, %s12, 3
        %s190 = smul.addr %s189, 16
        %s191 = smul.addr %s190, 8
        %s192 = scalar_lea.vmem %s0, %s191
      $region24: #{mha_forward.8} parent=19 // pred_fallthru
        _
      // Predicated region
      $region25: #{mha_forward.8} parent=19 // pred_check
        %p193 = pneg %p58
      $region26: #{mha_forward.8} parent=19 // pred_check_branch
        %195 = sbr.rel (%p193) target = $region28
      $region27: #{mha_forward.8} parent=19 // pred_region
        %p196 = scmp.lt.s32.totalorder %s12, 3
        %s197 = scalar_select %p196, %s12, 3
        %s198 = smul.addr %s197, 16
        %s199 = smul.addr %s198, 8
        %s200 = scalar_lea.vmem %s1, %s199
      $region28: #{mha_forward.8} parent=19 // pred_fallthru
        _
      // Predicated region
      $region29: #{mha_forward.8} parent=19 // pred_check
        %p201 = pneg %p84
      $region30: #{mha_forward.8} parent=19 // pred_check_branch
        %203 = sbr.rel (%p201) target = $region32
      $region31: #{mha_forward.8} parent=19 // pred_region
        %p204 = scmp.lt.s32.totalorder %s12, 3
        %s205 = scalar_select %p204, %s12, 3
        %s206 = smul.addr %s205, 16
        %s207 = smul.addr %s206, 8
        %s208 = scalar_lea.vmem %s2, %s207
      $region32: #{mha_forward.8} parent=19 // pred_fallthru
        _
    $region20: #{mha_forward.8} parent=5 // pred_fallthru
      _
    %p209 = scmp.le.s32.totalorder 1, %s12
    %p210 = scmp.lt.s32.totalorder %s12, 5
    %p211 = pnand %p209, %p210
    %p212 = pneg %p211
    // Predicated region
    $region33: #{mha_forward.8} parent=5 // pred_check
      _
    $region34: #{mha_forward.8} parent=5 // pred_check_branch
      %214 = sbr.rel (%p211) target = $region36
    $region35: #{mha_forward.8} parent=5 // pred_region
      %s215 = ssub.s32 %s12, 1
      %p216 = scmp.lt.s32.totalorder %s17, 3
      %s217 = scalar_select %p216, %s17, 3
      %s218 = smul.addr %s217, 16
      %s219 = smul.addr %s218, 8
      %s220 = scalar_lea.vmem %s0, %s219
      %p221 = pneg %p38
      %p222 = pneg %p35
      %p223 = scmp.lt.s32.totalorder %s17, 3
      %s224 = scalar_select %p223, %s17, 3
      %s225 = smul.addr %s224, 16
      %s226 = smul.addr %s225, 8
      %s227 = scalar_lea.vmem %s1, %s226
      %p228 = pneg %p64
      %p229 = pneg %p61
      %p230 = scmp.lt.s32.totalorder %s17, 3
      %s231 = scalar_select %p230, %s17, 3
      %s232 = smul.addr %s231, 16
      %s233 = smul.addr %s232, 8
      %s234 = scalar_lea.vmem %s2, %s233
      %p235 = pneg %p90
      %p236 = pneg %p87
      %p237 = pneg %p111
      %p238 = pneg %p108
      %p239 = pneg %p137
      %p240 = pneg %p134
      %p241 = scmp.lt.s32.totalorder %s17, 3
      %s242 = scalar_select %p241, %s17, 3
      %s243 = smul.addr %s242, 16
      %s244 = smul.addr %s243, 8
      %s245 = scalar_lea.vmem %s4, %s244
      %p246 = pneg %p163
      %p247 = pneg %p160
      %p248 = scmp.lt.s32.totalorder %s17, 3
      %s249 = scalar_select %p248, %s17, 3
      %s250 = smul.addr %s249, 16
      %s251 = smul.addr %s250, 8
      %s252 = scalar_lea.vmem %s5, %s251
      %p253 = scmp.lt.s32.totalorder %s17, 3
      %s254 = scalar_select %p253, %s17, 3
      %s255 = smul.addr %s254, 16
      %s256 = smul.addr %s255, 8
      %s257 = scalar_lea.vmem %s0, %s256
      %p258 = scmp.lt.s32.totalorder %s17, 3
      %s259 = scalar_select %p258, %s17, 3
      %s260 = smul.addr %s259, 16
      %s261 = smul.addr %s260, 8
      %s262 = scalar_lea.vmem %s1, %s261
      %p263 = scmp.lt.s32.totalorder %s17, 3
      %s264 = scalar_select %p263, %s17, 3
      %s265 = smul.addr %s264, 16
      %s266 = smul.addr %s265, 8
      %s267 = scalar_lea.vmem %s2, %s266
      %p268 = scmp.lt.s32.totalorder %s17, 3
      %s269 = scalar_select %p268, %s17, 3
      %s270 = smul.addr %s269, 16
      %s271 = smul.addr %s270, 8
      %s272 = scalar_lea.vmem %s4, %s271
      %p273 = scmp.lt.s32.totalorder %s17, 3
      %s274 = scalar_select %p273, %s17, 3
      %s275 = smul.addr %s274, 16
      %s276 = smul.addr %s275, 8
      %s277 = scalar_lea.vmem %s5, %s276
      %v278 = vld [vmem:[%s257] sm:$0xff]
      %v279 = vld [vmem:[%s257 + $0x8] sm:$0xff]
      %v280 = vld [vmem:[%s257 + $0x10] sm:$0xff]
      %v281 = vld [vmem:[%s257 + $0x18] sm:$0xff]
      %v282 = vld [vmem:[%s257 + $0x20] sm:$0xff]
      %v283 = vld [vmem:[%s257 + $0x28] sm:$0xff]
      %v284 = vld [vmem:[%s257 + $0x30] sm:$0xff]
      %v285 = vld [vmem:[%s257 + $0x38] sm:$0xff]
      %v286 = vld [vmem:[%s257 + $0x40] sm:$0xff]
      %v287 = vld [vmem:[%s257 + $0x48] sm:$0xff]
      %v288 = vld [vmem:[%s257 + $0x50] sm:$0xff]
      %v289 = vld [vmem:[%s257 + $0x58] sm:$0xff]
      %v290 = vld [vmem:[%s257 + $0x60] sm:$0xff]
      %v291 = vld [vmem:[%s257 + $0x68] sm:$0xff]
      %v292 = vld [vmem:[%s257 + $0x70] sm:$0xff]
      %v293 = vld [vmem:[%s257 + $0x78] sm:$0xff]
      %v294 = vld [vmem:[%s262] sm:$0xff]
      %v295 = vld [vmem:[%s262 + $0x8] sm:$0xff]
      %v296 = vld [vmem:[%s262 + $0x10] sm:$0xff]
      %v297 = vld [vmem:[%s262 + $0x18] sm:$0xff]
      %v298 = vld [vmem:[%s262 + $0x20] sm:$0xff]
      %v299 = vld [vmem:[%s262 + $0x28] sm:$0xff]
      %v300 = vld [vmem:[%s262 + $0x30] sm:$0xff]
      %v301 = vld [vmem:[%s262 + $0x38] sm:$0xff]
      %v302 = vld [vmem:[%s262 + $0x40] sm:$0xff]
      %v303 = vld [vmem:[%s262 + $0x48] sm:$0xff]
      %v304 = vld [vmem:[%s262 + $0x50] sm:$0xff]
      %v305 = vld [vmem:[%s262 + $0x58] sm:$0xff]
      %v306 = vld [vmem:[%s262 + $0x60] sm:$0xff]
      %v307 = vld [vmem:[%s262 + $0x68] sm:$0xff]
      %v308 = vld [vmem:[%s262 + $0x70] sm:$0xff]
      %v309 = vld [vmem:[%s262 + $0x78] sm:$0xff]
      %v310 = vld [vmem:[%s267] sm:$0xff]
      %v311 = vld [vmem:[%s267 + $0x8] sm:$0xff]
      %v312 = vld [vmem:[%s267 + $0x10] sm:$0xff]
      %v313 = vld [vmem:[%s267 + $0x18] sm:$0xff]
      %v314 = vld [vmem:[%s267 + $0x20] sm:$0xff]
      %v315 = vld [vmem:[%s267 + $0x28] sm:$0xff]
      %v316 = vld [vmem:[%s267 + $0x30] sm:$0xff]
      %v317 = vld [vmem:[%s267 + $0x38] sm:$0xff]
      %v318 = vld [vmem:[%s267 + $0x40] sm:$0xff]
      %v319 = vld [vmem:[%s267 + $0x48] sm:$0xff]
      %v320 = vld [vmem:[%s267 + $0x50] sm:$0xff]
      %v321 = vld [vmem:[%s267 + $0x58] sm:$0xff]
      %v322 = vld [vmem:[%s267 + $0x60] sm:$0xff]
      %v323 = vld [vmem:[%s267 + $0x68] sm:$0xff]
      %v324 = vld [vmem:[%s267 + $0x70] sm:$0xff]
      %v325 = vld [vmem:[%s267 + $0x78] sm:$0xff]
      %vm326 = vcmask 523264
      %v328 = vsel %vm326, %v278, 0
      %v331 = vsel %vm326, %v279, 0
      %v334 = vsel %vm326, %v280, 0
      %v337 = vsel %vm326, %v281, 0
      %v340 = vsel %vm326, %v282, 0
      %v343 = vsel %vm326, %v283, 0
      %v346 = vsel %vm326, %v284, 0
      %v349 = vsel %vm326, %v285, 0
      %v352 = vsel %vm326, %v286, 0
      %v355 = vsel %vm326, %v287, 0
      %v358 = vsel %vm326, %v288, 0
      %v361 = vsel %vm326, %v289, 0
      %v364 = vsel %vm326, %v290, 0
      %v367 = vsel %vm326, %v291, 0
      %v370 = vsel %vm326, %v292, 0
      %v373 = vsel %vm326, %v293, 0
      %v376 = vsel %vm326, %v294, 0
      %v379 = vsel %vm326, %v295, 0
      %v382 = vsel %vm326, %v296, 0
      %v385 = vsel %vm326, %v297, 0
      %v388 = vsel %vm326, %v298, 0
      %v391 = vsel %vm326, %v299, 0
      %v394 = vsel %vm326, %v300, 0
      %v397 = vsel %vm326, %v301, 0
      %v400 = vsel %vm326, %v302, 0
      %v403 = vsel %vm326, %v303, 0
      %v406 = vsel %vm326, %v304, 0
      %v409 = vsel %vm326, %v305, 0
      %v412 = vsel %vm326, %v306, 0
      %v415 = vsel %vm326, %v307, 0
      %v418 = vsel %vm326, %v308, 0
      %v421 = vsel %vm326, %v309, 0
      %423 = vmatprep.subr.mxu0 0.0
      %424 = vmatpush1.xpose.msra.mxu0 %v376
      %425 = vmatprep.subr.mxu0 0.0
      %426 = vmatpush1.xpose.msra.mxu0 %v379
      %427 = vmatprep.subr.mxu0 0.0
      %428 = vmatpush1.xpose.msra.mxu0 %v382
      %429 = vmatprep.subr.mxu0 0.0
      %430 = vmatpush1.xpose.msra.mxu0 %v385
      %431 = vmatprep.subr.mxu0 0.0
      %432 = vmatpush1.xpose.msra.mxu0 %v388
      %433 = vmatprep.subr.mxu0 0.0
      %434 = vmatpush1.xpose.msra.mxu0 %v391
      %435 = vmatprep.subr.mxu0 0.0
      %436 = vmatpush1.xpose.msra.mxu0 %v394
      %437 = vmatprep.subr.mxu0 0.0
      %438 = vmatpush1.xpose.msra.mxu0 %v397
      %439 = vmatprep.subr.mxu0 0.0
      %440 = vmatpush1.xpose.msra.mxu0 %v400
      %441 = vmatprep.subr.mxu0 0.0
      %442 = vmatpush1.xpose.msra.mxu0 %v403
      %443 = vmatprep.subr.mxu0 0.0
      %444 = vmatpush1.xpose.msra.mxu0 %v406
      %445 = vmatprep.subr.mxu0 0.0
      %446 = vmatpush1.xpose.msra.mxu0 %v409
      %447 = vmatprep.subr.mxu0 0.0
      %448 = vmatpush1.xpose.msra.mxu0 %v412
      %449 = vmatprep.subr.mxu0 0.0
      %450 = vmatpush1.xpose.msra.mxu0 %v415
      %451 = vmatprep.subr.mxu0 0.0
      %452 = vmatpush1.xpose.msra.mxu0 %v418
      %453 = vmatprep.subr.mxu0 0.0
      %454 = vmatpush1.xpose.msra.mxu0 %v421
      %455 = vmatprep.subr.mxu0 0.0
      %456 = vmatpush1.xpose.msra.mxu0 0.0
      %457 = vmatprep.subr.mxu0 0.0
      %458 = vmatpush1.xpose.msra.mxu0 0.0
      %459 = vmatprep.subr.mxu0 0.0
      %460 = vmatpush1.xpose.msra.mxu0 0.0
      %461 = vmatprep.subr.mxu0 0.0
      %462 = vmatpush1.xpose.msra.mxu0 0.0
      %463 = vmatprep.subr.mxu0 0.0
      %464 = vmatpush1.xpose.msra.mxu0 0.0
      %465 = vmatprep.subr.mxu0 0.0
      %466 = vmatpush1.xpose.msra.mxu0 0.0
      %467 = vmatprep.subr.mxu0 0.0
      %468 = vmatpush1.xpose.msra.mxu0 0.0
      %469 = vmatprep.subr.mxu0 0.0
      %470 = vmatpush1.xpose.msra.mxu0 0.0
      %471 = vmatprep.subr.mxu0 0.0
      %472 = vmatpush1.xpose.msra.mxu0 0.0
      %473 = vmatprep.subr.mxu0 0.0
      %474 = vmatpush1.xpose.msra.mxu0 0.0
      %475 = vmatprep.subr.mxu0 0.0
      %476 = vmatpush1.xpose.msra.mxu0 0.0
      %477 = vmatprep.subr.mxu0 0.0
      %478 = vmatpush1.xpose.msra.mxu0 0.0
      %479 = vmatprep.subr.mxu0 0.0
      %480 = vmatpush1.xpose.msra.mxu0 0.0
      %481 = vmatprep.subr.mxu0 0.0
      %482 = vmatpush1.xpose.msra.mxu0 0.0
      %483 = vmatprep.subr.mxu0 0.0
      %484 = vmatpush1.xpose.msra.mxu0 0.0
      %485 = vmatprep.subr.mxu0 0.0
      %486 = vmatpush1.xpose.msra.mxu0 0.0
      %487 = vmatprep.mubr.f32.mxu0 0.0
      %488 = vmatmul.mubr.f32.gmra.mrb[0].mxu0 %v328
      %v489 = vpop.f32.mrb[0].mxu0
      %v490 = vadd.f32 0.0, %v489
      %v491 = vpop.f32.mrb[0].mxu0
      %492 = vmatprep.mubr.f32.mxu0 0.0
      %493 = vmatmul.mubr.f32.gmra.mrb[0].mxu0 %v331
      %v494 = vpop.f32.mrb[0].mxu0
      %v495 = vadd.f32 0.0, %v494
      %v496 = vpop.f32.mrb[0].mxu0
      %497 = vmatprep.mubr.f32.mxu0 0.0
      %498 = vmatmul.mubr.f32.gmra.mrb[0].mxu0 %v334
      %v499 = vpop.f32.mrb[0].mxu0
      %v500 = vadd.f32 0.0, %v499
      %v501 = vpop.f32.mrb[0].mxu0
      %502 = vmatprep.mubr.f32.mxu0 0.0
      %503 = vmatmul.mubr.f32.gmra.mrb[0].mxu0 %v337
      %v504 = vpop.f32.mrb[0].mxu0
      %v505 = vadd.f32 0.0, %v504
      %v506 = vpop.f32.mrb[0].mxu0
      %507 = vmatprep.mubr.f32.mxu0 0.0
      %508 = vmatmul.mubr.f32.gmra.mrb[0].mxu0 %v340
      %v509 = vpop.f32.mrb[0].mxu0
      %v510 = vadd.f32 0.0, %v509
      %v511 = vpop.f32.mrb[0].mxu0
      %512 = vmatprep.mubr.f32.mxu0 0.0
      %513 = vmatmul.mubr.f32.gmra.mrb[0].mxu0 %v343
      %v514 = vpop.f32.mrb[0].mxu0
      %v515 = vadd.f32 0.0, %v514
      %v516 = vpop.f32.mrb[0].mxu0
      %517 = vmatprep.mubr.f32.mxu0 0.0
      %518 = vmatmul.mubr.f32.gmra.mrb[0].mxu0 %v346
      %v519 = vpop.f32.mrb[0].mxu0
      %v520 = vadd.f32 0.0, %v519
      %v521 = vpop.f32.mrb[0].mxu0
      %522 = vmatprep.mubr.f32.mxu0 0.0
      %523 = vmatmul.mubr.f32.gmra.mrb[0].mxu0 %v349
      %v524 = vpop.f32.mrb[0].mxu0
      %v525 = vadd.f32 0.0, %v524
      %v526 = vpop.f32.mrb[0].mxu0
      %527 = vmatprep.mubr.f32.mxu0 0.0
      %528 = vmatmul.mubr.f32.gmra.mrb[0].mxu0 %v352
      %v529 = vpop.f32.mrb[0].mxu0
      %v530 = vadd.f32 0.0, %v529
      %v531 = vpop.f32.mrb[0].mxu0
      %532 = vmatprep.mubr.f32.mxu0 0.0
      %533 = vmatmul.mubr.f32.gmra.mrb[0].mxu0 %v355
      %v534 = vpop.f32.mrb[0].mxu0
      %v535 = vadd.f32 0.0, %v534
      %v536 = vpop.f32.mrb[0].mxu0
      %537 = vmatprep.mubr.f32.mxu0 0.0
      %538 = vmatmul.mubr.f32.gmra.mrb[0].mxu0 %v358
      %v539 = vpop.f32.mrb[0].mxu0
      %v540 = vadd.f32 0.0, %v539
      %v541 = vpop.f32.mrb[0].mxu0
      %542 = vmatprep.mubr.f32.mxu0 0.0
      %543 = vmatmul.mubr.f32.gmra.mrb[0].mxu0 %v361
      %v544 = vpop.f32.mrb[0].mxu0
      %v545 = vadd.f32 0.0, %v544
      %v546 = vpop.f32.mrb[0].mxu0
      %547 = vmatprep.mubr.f32.mxu0 0.0
      %548 = vmatmul.mubr.f32.gmra.mrb[0].mxu0 %v364
      %v549 = vpop.f32.mrb[0].mxu0
      %v550 = vadd.f32 0.0, %v549
      %v551 = vpop.f32.mrb[0].mxu0
      %552 = vmatprep.mubr.f32.mxu0 0.0
      %553 = vmatmul.mubr.f32.gmra.mrb[0].mxu0 %v367
      %v554 = vpop.f32.mrb[0].mxu0
      %v555 = vadd.f32 0.0, %v554
      %v556 = vpop.f32.mrb[0].mxu0
      %557 = vmatprep.mubr.f32.mxu0 0.0
      %558 = vmatmul.mubr.f32.gmra.mrb[0].mxu0 %v370
      %v559 = vpop.f32.mrb[0].mxu0
      %v560 = vadd.f32 0.0, %v559
      %v561 = vpop.f32.mrb[0].mxu0
      %562 = vmatprep.mubr.f32.mxu0 0.0
      %563 = vmatmul.mubr.f32.gmra.mrb[0].mxu0 %v373
      %v564 = vpop.f32.mrb[0].mxu0
      %v565 = vadd.f32 0.0, %v564
      %v566 = vpop.f32.mrb[0].mxu0
      %567 = vdwg.mxu0
      %v568 = vmul.f32 %v490, 0.125
      %v569 = vmul.f32 %v495, 0.125
      %v570 = vmul.f32 %v500, 0.125
      %v571 = vmul.f32 %v505, 0.125
      %v572 = vmul.f32 %v510, 0.125
      %v573 = vmul.f32 %v515, 0.125
      %v574 = vmul.f32 %v520, 0.125
      %v575 = vmul.f32 %v525, 0.125
      %v576 = vmul.f32 %v530, 0.125
      %v577 = vmul.f32 %v535, 0.125
      %v578 = vmul.f32 %v540, 0.125
      %v579 = vmul.f32 %v545, 0.125
      %v580 = vmul.f32 %v550, 0.125
      %v581 = vmul.f32 %v555, 0.125
      %v582 = vmul.f32 %v560, 0.125
      %v583 = vmul.f32 %v565, 0.125
      %v584 = vld [vmem:[%s3] sm:$0xff]
      %v585 = vld [vmem:[%s3 + $0x8] sm:$0xff]
      %v586 = vld [vmem:[%s3 + $0x10] sm:$0xff]
      %v587 = vld [vmem:[%s3 + $0x18] sm:$0xff]
      %v588 = vld [vmem:[%s3 + $0x20] sm:$0xff]
      %v589 = vld [vmem:[%s3 + $0x28] sm:$0xff]
      %v590 = vld [vmem:[%s3 + $0x30] sm:$0xff]
      %v591 = vld [vmem:[%s3 + $0x38] sm:$0xff]
      %v592 = vld [vmem:[%s3 + $0x40] sm:$0xff]
      %v593 = vld [vmem:[%s3 + $0x48] sm:$0xff]
      %v594 = vld [vmem:[%s3 + $0x50] sm:$0xff]
      %v595 = vld [vmem:[%s3 + $0x58] sm:$0xff]
      %v596 = vld [vmem:[%s3 + $0x60] sm:$0xff]
      %v597 = vld [vmem:[%s3 + $0x68] sm:$0xff]
      %v598 = vld [vmem:[%s3 + $0x70] sm:$0xff]
      %v599 = vld [vmem:[%s3 + $0x78] sm:$0xff]
      %v600 = vadd.f32 %v568, %v584
      %v601 = vadd.f32 %v569, %v585
      %v602 = vadd.f32 %v570, %v586
      %v603 = vadd.f32 %v571, %v587
      %v604 = vadd.f32 %v572, %v588
      %v605 = vadd.f32 %v573, %v589
      %v606 = vadd.f32 %v574, %v590
      %v607 = vadd.f32 %v575, %v591
      %v608 = vadd.f32 %v576, %v592
      %v609 = vadd.f32 %v577, %v593
      %v610 = vadd.f32 %v578, %v594
      %v611 = vadd.f32 %v579, %v595
      %v612 = vadd.f32 %v580, %v596
      %v613 = vadd.f32 %v581, %v597
      %v614 = vadd.f32 %v582, %v598
      %v615 = vadd.f32 %v583, %v599
      %616 = vmax.xlane.f32.xlu0 %v600
      %v617 = vpop.xlane.xlu0 %616
      %618 = vmax.xlane.f32.xlu0 %v601
      %v619 = vpop.xlane.xlu0 %618
      %620 = vmax.xlane.f32.xlu0 %v602
      %v621 = vpop.xlane.xlu0 %620
      %622 = vmax.xlane.f32.xlu0 %v603
      %v623 = vpop.xlane.xlu0 %622
      %624 = vmax.xlane.f32.xlu0 %v604
      %v625 = vpop.xlane.xlu0 %624
      %626 = vmax.xlane.f32.xlu0 %v605
      %v627 = vpop.xlane.xlu0 %626
      %628 = vmax.xlane.f32.xlu0 %v606
      %v629 = vpop.xlane.xlu0 %628
      %630 = vmax.xlane.f32.xlu0 %v607
      %v631 = vpop.xlane.xlu0 %630
      %632 = vmax.xlane.f32.xlu0 %v608
      %v633 = vpop.xlane.xlu0 %632
      %634 = vmax.xlane.f32.xlu0 %v609
      %v635 = vpop.xlane.xlu0 %634
      %636 = vmax.xlane.f32.xlu0 %v610
      %v637 = vpop.xlane.xlu0 %636
      %638 = vmax.xlane.f32.xlu0 %v611
      %v639 = vpop.xlane.xlu0 %638
      %640 = vmax.xlane.f32.xlu0 %v612
      %v641 = vpop.xlane.xlu0 %640
      %642 = vmax.xlane.f32.xlu0 %v613
      %v643 = vpop.xlane.xlu0 %642
      %644 = vmax.xlane.f32.xlu0 %v614
      %v645 = vpop.xlane.xlu0 %644
      %646 = vmax.xlane.f32.xlu0 %v615
      %v647 = vpop.xlane.xlu0 %646
      %v648 = vsub.f32 %v600, %v617
      %v649 = vsub.f32 %v601, %v619
      %v650 = vsub.f32 %v602, %v621
      %v651 = vsub.f32 %v603, %v623
      %v652 = vsub.f32 %v604, %v625
      %v653 = vsub.f32 %v605, %v627
      %v654 = vsub.f32 %v606, %v629
      %v655 = vsub.f32 %v607, %v631
      %v656 = vsub.f32 %v608, %v633
      %v657 = vsub.f32 %v609, %v635
      %v658 = vsub.f32 %v610, %v637
      %v659 = vsub.f32 %v611, %v639
      %v660 = vsub.f32 %v612, %v641
      %v661 = vsub.f32 %v613, %v643
      %v662 = vsub.f32 %v614, %v645
      %v663 = vsub.f32 %v615, %v647
      %v664 = vmul.f32 %v648, 1.442695
      %v665 = vpow.pop %v664
      %v666 = vmul.f32 %v649, 1.442695
      %v667 = vpow.pop %v666
      %v668 = vmul.f32 %v650, 1.442695
      %v669 = vpow.pop %v668
      %v670 = vmul.f32 %v651, 1.442695
      %v671 = vpow.pop %v670
      %v672 = vmul.f32 %v652, 1.442695
      %v673 = vpow.pop %v672
      %v674 = vmul.f32 %v653, 1.442695
      %v675 = vpow.pop %v674
      %v676 = vmul.f32 %v654, 1.442695
      %v677 = vpow.pop %v676
      %v678 = vmul.f32 %v655, 1.442695
      %v679 = vpow.pop %v678
      %v680 = vmul.f32 %v656, 1.442695
      %v681 = vpow.pop %v680
      %v682 = vmul.f32 %v657, 1.442695
      %v683 = vpow.pop %v682
      %v684 = vmul.f32 %v658, 1.442695
      %v685 = vpow.pop %v684
      %v686 = vmul.f32 %v659, 1.442695
      %v687 = vpow.pop %v686
      %v688 = vmul.f32 %v660, 1.442695
      %v689 = vpow.pop %v688
      %v690 = vmul.f32 %v661, 1.442695
      %v691 = vpow.pop %v690
      %v692 = vmul.f32 %v662, 1.442695
      %v693 = vpow.pop %v692
      %v694 = vmul.f32 %v663, 1.442695
      %v695 = vpow.pop %v694
      %696 = vadd.xlane.f32.xlu0 %v665
      %v697 = vpop.xlane.xlu0 %696
      %698 = vadd.xlane.f32.xlu0 %v667
      %v699 = vpop.xlane.xlu0 %698
      %700 = vadd.xlane.f32.xlu0 %v669
      %v701 = vpop.xlane.xlu0 %700
      %702 = vadd.xlane.f32.xlu0 %v671
      %v703 = vpop.xlane.xlu0 %702
      %704 = vadd.xlane.f32.xlu0 %v673
      %v705 = vpop.xlane.xlu0 %704
      %706 = vadd.xlane.f32.xlu0 %v675
      %v707 = vpop.xlane.xlu0 %706
      %708 = vadd.xlane.f32.xlu0 %v677
      %v709 = vpop.xlane.xlu0 %708
      %710 = vadd.xlane.f32.xlu0 %v679
      %v711 = vpop.xlane.xlu0 %710
      %712 = vadd.xlane.f32.xlu0 %v681
      %v713 = vpop.xlane.xlu0 %712
      %714 = vadd.xlane.f32.xlu0 %v683
      %v715 = vpop.xlane.xlu0 %714
      %716 = vadd.xlane.f32.xlu0 %v685
      %v717 = vpop.xlane.xlu0 %716
      %718 = vadd.xlane.f32.xlu0 %v687
      %v719 = vpop.xlane.xlu0 %718
      %720 = vadd.xlane.f32.xlu0 %v689
      %v721 = vpop.xlane.xlu0 %720
      %722 = vadd.xlane.f32.xlu0 %v691
      %v723 = vpop.xlane.xlu0 %722
      %724 = vadd.xlane.f32.xlu0 %v693
      %v725 = vpop.xlane.xlu0 %724
      %726 = vadd.xlane.f32.xlu0 %v695
      %v727 = vpop.xlane.xlu0 %726
      %v728 = vrcp.pop %v697
      %v729 = vmul.f32 %v665, %v728
      %v730 = vrcp.pop %v699
      %v731 = vmul.f32 %v667, %v730
      %v732 = vrcp.pop %v701
      %v733 = vmul.f32 %v669, %v732
      %v734 = vrcp.pop %v703
      %v735 = vmul.f32 %v671, %v734
      %v736 = vrcp.pop %v705
      %v737 = vmul.f32 %v673, %v736
      %v738 = vrcp.pop %v707
      %v739 = vmul.f32 %v675, %v738
      %v740 = vrcp.pop %v709
      %v741 = vmul.f32 %v677, %v740
      %v742 = vrcp.pop %v711
      %v743 = vmul.f32 %v679, %v742
      %v744 = vrcp.pop %v713
      %v745 = vmul.f32 %v681, %v744
      %v746 = vrcp.pop %v715
      %v747 = vmul.f32 %v683, %v746
      %v748 = vrcp.pop %v717
      %v749 = vmul.f32 %v685, %v748
      %v750 = vrcp.pop %v719
      %v751 = vmul.f32 %v687, %v750
      %v752 = vrcp.pop %v721
      %v753 = vmul.f32 %v689, %v752
      %v754 = vrcp.pop %v723
      %v755 = vmul.f32 %v691, %v754
      %v756 = vrcp.pop %v725
      %v757 = vmul.f32 %v693, %v756
      %v758 = vrcp.pop %v727
      %v759 = vmul.f32 %v695, %v758
      %760 = vmatprep.subr.mxu0 0.0
      %761 = vmatpush1.msra.mxu0 %v310
      %762 = vmatprep.subr.mxu0 0.0
      %763 = vmatpush1.msra.mxu0 %v311
      %764 = vmatprep.subr.mxu0 0.0
      %765 = vmatpush1.msra.mxu0 %v312
      %766 = vmatprep.subr.mxu0 0.0
      %767 = vmatpush1.msra.mxu0 %v313
      %768 = vmatprep.subr.mxu0 0.0
      %769 = vmatpush1.msra.mxu0 %v314
      %770 = vmatprep.subr.mxu0 0.0
      %771 = vmatpush1.msra.mxu0 %v315
      %772 = vmatprep.subr.mxu0 0.0
      %773 = vmatpush1.msra.mxu0 %v316
      %774 = vmatprep.subr.mxu0 0.0
      %775 = vmatpush1.msra.mxu0 %v317
      %776 = vmatprep.subr.mxu0 0.0
      %777 = vmatpush1.msra.mxu0 %v318
      %778 = vmatprep.subr.mxu0 0.0
      %779 = vmatpush1.msra.mxu0 %v319
      %780 = vmatprep.subr.mxu0 0.0
      %781 = vmatpush1.msra.mxu0 %v320
      %782 = vmatprep.subr.mxu0 0.0
      %783 = vmatpush1.msra.mxu0 %v321
      %784 = vmatprep.subr.mxu0 0.0
      %785 = vmatpush1.msra.mxu0 %v322
      %786 = vmatprep.subr.mxu0 0.0
      %787 = vmatpush1.msra.mxu0 %v323
      %788 = vmatprep.subr.mxu0 0.0
      %789 = vmatpush1.msra.mxu0 %v324
      %790 = vmatprep.subr.mxu0 0.0
      %791 = vmatpush1.msra.mxu0 %v325
      %792 = vmatprep.subr.mxu0 0.0
      %793 = vmatpush1.msra.mxu0 0.0
      %794 = vmatprep.subr.mxu0 0.0
      %795 = vmatpush1.msra.mxu0 0.0
      %796 = vmatprep.subr.mxu0 0.0
      %797 = vmatpush1.msra.mxu0 0.0
      %798 = vmatprep.subr.mxu0 0.0
      %799 = vmatpush1.msra.mxu0 0.0
      %800 = vmatprep.subr.mxu0 0.0
      %801 = vmatpush1.msra.mxu0 0.0
      %802 = vmatprep.subr.mxu0 0.0
      %803 = vmatpush1.msra.mxu0 0.0
      %804 = vmatprep.subr.mxu0 0.0
      %805 = vmatpush1.msra.mxu0 0.0
      %806 = vmatprep.subr.mxu0 0.0
      %807 = vmatpush1.msra.mxu0 0.0
      %808 = vmatprep.subr.mxu0 0.0
      %809 = vmatpush1.msra.mxu0 0.0
      %810 = vmatprep.subr.mxu0 0.0
      %811 = vmatpush1.msra.mxu0 0.0
      %812 = vmatprep.subr.mxu0 0.0
      %813 = vmatpush1.msra.mxu0 0.0
      %814 = vmatprep.subr.mxu0 0.0
      %815 = vmatpush1.msra.mxu0 0.0
      %816 = vmatprep.subr.mxu0 0.0
      %817 = vmatpush1.msra.mxu0 0.0
      %818 = vmatprep.subr.mxu0 0.0
      %819 = vmatpush1.msra.mxu0 0.0
      %820 = vmatprep.subr.mxu0 0.0
      %821 = vmatpush1.msra.mxu0 0.0
      %822 = vmatprep.subr.mxu0 0.0
      %823 = vmatpush1.msra.mxu0 0.0
      %824 = vmatprep.mubr.f32.mxu0 0.0
      %825 = vmatmul.mubr.f32.gmra.mrb[0].mxu0 %v729
      %v826 = vpop.f32.mrb[0].mxu0
      %v827 = vadd.f32 0.0, %v826
      %v828 = vpop.f32.mrb[0].mxu0
      %829 = vmatprep.mubr.f32.mxu0 0.0
      %830 = vmatmul.mubr.f32.gmra.mrb[0].mxu0 %v731
      %v831 = vpop.f32.mrb[0].mxu0
      %v832 = vadd.f32 0.0, %v831
      %v833 = vpop.f32.mrb[0].mxu0
      %834 = vmatprep.mubr.f32.mxu0 0.0
      %835 = vmatmul.mubr.f32.gmra.mrb[0].mxu0 %v733
      %v836 = vpop.f32.mrb[0].mxu0
      %v837 = vadd.f32 0.0, %v836
      %v838 = vpop.f32.mrb[0].mxu0
      %839 = vmatprep.mubr.f32.mxu0 0.0
      %840 = vmatmul.mubr.f32.gmra.mrb[0].mxu0 %v735
      %v841 = vpop.f32.mrb[0].mxu0
      %v842 = vadd.f32 0.0, %v841
      %v843 = vpop.f32.mrb[0].mxu0
      %844 = vmatprep.mubr.f32.mxu0 0.0
      %845 = vmatmul.mubr.f32.gmra.mrb[0].mxu0 %v737
      %v846 = vpop.f32.mrb[0].mxu0
      %v847 = vadd.f32 0.0, %v846
      %v848 = vpop.f32.mrb[0].mxu0
      %849 = vmatprep.mubr.f32.mxu0 0.0
      %850 = vmatmul.mubr.f32.gmra.mrb[0].mxu0 %v739
      %v851 = vpop.f32.mrb[0].mxu0
      %v852 = vadd.f32 0.0, %v851
      %v853 = vpop.f32.mrb[0].mxu0
      %854 = vmatprep.mubr.f32.mxu0 0.0
      %855 = vmatmul.mubr.f32.gmra.mrb[0].mxu0 %v741
      %v856 = vpop.f32.mrb[0].mxu0
      %v857 = vadd.f32 0.0, %v856
      %v858 = vpop.f32.mrb[0].mxu0
      %859 = vmatprep.mubr.f32.mxu0 0.0
      %860 = vmatmul.mubr.f32.gmra.mrb[0].mxu0 %v743
      %v861 = vpop.f32.mrb[0].mxu0
      %v862 = vadd.f32 0.0, %v861
      %v863 = vpop.f32.mrb[0].mxu0
      %864 = vmatprep.mubr.f32.mxu0 0.0
      %865 = vmatmul.mubr.f32.gmra.mrb[0].mxu0 %v745
      %v866 = vpop.f32.mrb[0].mxu0
      %v867 = vadd.f32 0.0, %v866
      %v868 = vpop.f32.mrb[0].mxu0
      %869 = vmatprep.mubr.f32.mxu0 0.0
      %870 = vmatmul.mubr.f32.gmra.mrb[0].mxu0 %v747
      %v871 = vpop.f32.mrb[0].mxu0
      %v872 = vadd.f32 0.0, %v871
      %v873 = vpop.f32.mrb[0].mxu0
      %874 = vmatprep.mubr.f32.mxu0 0.0
      %875 = vmatmul.mubr.f32.gmra.mrb[0].mxu0 %v749
      %v876 = vpop.f32.mrb[0].mxu0
      %v877 = vadd.f32 0.0, %v876
      %v878 = vpop.f32.mrb[0].mxu0
      %879 = vmatprep.mubr.f32.mxu0 0.0
      %880 = vmatmul.mubr.f32.gmra.mrb[0].mxu0 %v751
      %v881 = vpop.f32.mrb[0].mxu0
      %v882 = vadd.f32 0.0, %v881
      %v883 = vpop.f32.mrb[0].mxu0
      %884 = vmatprep.mubr.f32.mxu0 0.0
      %885 = vmatmul.mubr.f32.gmra.mrb[0].mxu0 %v753
      %v886 = vpop.f32.mrb[0].mxu0
      %v887 = vadd.f32 0.0, %v886
      %v888 = vpop.f32.mrb[0].mxu0
      %889 = vmatprep.mubr.f32.mxu0 0.0
      %890 = vmatmul.mubr.f32.gmra.mrb[0].mxu0 %v755
      %v891 = vpop.f32.mrb[0].mxu0
      %v892 = vadd.f32 0.0, %v891
      %v893 = vpop.f32.mrb[0].mxu0
      %894 = vmatprep.mubr.f32.mxu0 0.0
      %895 = vmatmul.mubr.f32.gmra.mrb[0].mxu0 %v757
      %v896 = vpop.f32.mrb[0].mxu0
      %v897 = vadd.f32 0.0, %v896
      %v898 = vpop.f32.mrb[0].mxu0
      %899 = vmatprep.mubr.f32.mxu0 0.0
      %900 = vmatmul.mubr.f32.gmra.mrb[0].mxu0 %v759
      %v901 = vpop.f32.mrb[0].mxu0
      %v902 = vadd.f32 0.0, %v901
      %v903 = vpop.f32.mrb[0].mxu0
      %904 = vdwg.mxu0
      %905 = vst.msk [vmem:[%s272] sm:$0xff] %vm326, %v827
      %906 = vst.msk [vmem:[%s272 + $0x8] sm:$0xff] %vm326, %v832
      %907 = vst.msk [vmem:[%s272 + $0x10] sm:$0xff] %vm326, %v837
      %908 = vst.msk [vmem:[%s272 + $0x18] sm:$0xff] %vm326, %v842
      %909 = vst.msk [vmem:[%s272 + $0x20] sm:$0xff] %vm326, %v847
      %910 = vst.msk [vmem:[%s272 + $0x28] sm:$0xff] %vm326, %v852
      %911 = vst.msk [vmem:[%s272 + $0x30] sm:$0xff] %vm326, %v857
      %912 = vst.msk [vmem:[%s272 + $0x38] sm:$0xff] %vm326, %v862
      %913 = vst.msk [vmem:[%s272 + $0x40] sm:$0xff] %vm326, %v867
      %914 = vst.msk [vmem:[%s272 + $0x48] sm:$0xff] %vm326, %v872
      %915 = vst.msk [vmem:[%s272 + $0x50] sm:$0xff] %vm326, %v877
      %916 = vst.msk [vmem:[%s272 + $0x58] sm:$0xff] %vm326, %v882
      %917 = vst.msk [vmem:[%s272 + $0x60] sm:$0xff] %vm326, %v887
      %918 = vst.msk [vmem:[%s272 + $0x68] sm:$0xff] %vm326, %v892
      %919 = vst.msk [vmem:[%s272 + $0x70] sm:$0xff] %vm326, %v897
      %920 = vst.msk [vmem:[%s272 + $0x78] sm:$0xff] %vm326, %v902
      %921 = vst [vmem:[%s277] sm:$0xff] %v729
      %922 = vst [vmem:[%s277 + $0x8] sm:$0xff] %v731
      %923 = vst [vmem:[%s277 + $0x10] sm:$0xff] %v733
      %924 = vst [vmem:[%s277 + $0x18] sm:$0xff] %v735
      %925 = vst [vmem:[%s277 + $0x20] sm:$0xff] %v737
      %926 = vst [vmem:[%s277 + $0x28] sm:$0xff] %v739
      %927 = vst [vmem:[%s277 + $0x30] sm:$0xff] %v741
      %928 = vst [vmem:[%s277 + $0x38] sm:$0xff] %v743
      %929 = vst [vmem:[%s277 + $0x40] sm:$0xff] %v745
      %930 = vst [vmem:[%s277 + $0x48] sm:$0xff] %v747
      %931 = vst [vmem:[%s277 + $0x50] sm:$0xff] %v749
      %932 = vst [vmem:[%s277 + $0x58] sm:$0xff] %v751
      %933 = vst [vmem:[%s277 + $0x60] sm:$0xff] %v753
      %934 = vst [vmem:[%s277 + $0x68] sm:$0xff] %v755
      %935 = vst [vmem:[%s277 + $0x70] sm:$0xff] %v757
      %936 = vst [vmem:[%s277 + $0x78] sm:$0xff] %v759
      %p937 = scmp.lt.s32.totalorder %s17, 3
      %s938 = scalar_select %p937, %s17, 3
      %s939 = smul.addr %s938, 16
      %s940 = smul.addr %s939, 8
      %s941 = scalar_lea.vmem %s4, %s940
      %p942 = scmp.lt.s32.totalorder %s17, 3
      %s943 = scalar_select %p942, %s17, 3
      %s944 = smul.addr %s943, 16
      %s945 = smul.addr %s944, 8
      %s946 = scalar_lea.vmem %s5, %s945
      // Predicated region
      $region37: #{mha_forward.8} parent=35 // pred_check
        %p947 = pneg %p134
      $region38: #{mha_forward.8} parent=35 // pred_check_branch
        %949 = sbr.rel (%p947) target = $region40
      $region39: #{mha_forward.8} parent=35 // pred_region
        _
      $region40: #{mha_forward.8} parent=35 // pred_fallthru
        _
      // Predicated region
      $region41: #{mha_forward.8} parent=35 // pred_check
        %p950 = pneg %p160
      $region42: #{mha_forward.8} parent=35 // pred_check_branch
        %952 = sbr.rel (%p950) target = $region44
      $region43: #{mha_forward.8} parent=35 // pred_region
        _
      $region44: #{mha_forward.8} parent=35 // pred_fallthru
        _
    $region36: #{mha_forward.8} parent=5 // pred_fallthru
      _
    %p953 = scmp.le.s32.totalorder 2, %s12
    // Predicated region
    $region45: #{mha_forward.8} parent=5 // pred_check
      %p954 = pneg %p953
    $region46: #{mha_forward.8} parent=5 // pred_check_branch
      %956 = sbr.rel (%p954) target = $region48
    $region47: #{mha_forward.8} parent=5 // pred_region
      %s957 = ssub.s32 %s12, 2
      // Predicated region
      $region49: #{mha_forward.8} parent=47 // pred_check
        %p958 = pneg %p140
      $region50: #{mha_forward.8} parent=47 // pred_check_branch
        %960 = sbr.rel (%p958) target = $region52
      $region51: #{mha_forward.8} parent=47 // pred_region
        %p961 = scmp.lt.s32.totalorder %s18, 3
        %s962 = scalar_select %p961, %s18, 3
        %s963 = smul.addr %s962, 16
        %s964 = smul.addr %s963, 8
        %s965 = scalar_lea.vmem %s4, %s964
      $region52: #{mha_forward.8} parent=47 // pred_fallthru
        _
      // Predicated region
      $region53: #{mha_forward.8} parent=47 // pred_check
        %p966 = pneg %p166
      $region54: #{mha_forward.8} parent=47 // pred_check_branch
        %968 = sbr.rel (%p966) target = $region56
      $region55: #{mha_forward.8} parent=47 // pred_region
        %p969 = scmp.lt.s32.totalorder %s18, 3
        %s970 = scalar_select %p969, %s18, 3
        %s971 = smul.addr %s970, 16
        %s972 = smul.addr %s971, 8
        %s973 = scalar_lea.vmem %s5, %s972
      $region56: #{mha_forward.8} parent=47 // pred_fallthru
        _
    $region48: #{mha_forward.8} parent=5 // pred_fallthru
      _
  $region6: #{mha_forward.8} parent=0 // loop_footer
    %s16 = sadd.s32 1, %s12
  $region7: #{mha_forward.8} parent=0 // loop_footer_branch
    %11 = sbr.rel target = $region3
  $region8: #{mha_forward.8} parent=0 // loop_exit
    _

// kernel: mha_forward.9
$region0: #{mha_forward.9}
  #allocation0 [shape = 'u32[]', space=smem, size = 0x4, offset = 0x4, fixed_abs, tag = 'smem constant byte address 0x4 - core index']
  #allocation1 [shape = 'u32[144,128]{1,0:T(1,128)}', space=vmem, size = 0x12000, scoped, tag = 'internal scratch']
  %s0 = inlined_call_operand.vmem [shape: f32[256,128], index: 0, kind: input, shape index: {}]
  %s1 = inlined_call_operand.vmem [shape: f32[128,128], index: 1, kind: input, shape index: {}]
  %s2 = inlined_call_operand.vmem [shape: f32[1,128], index: 2, kind: input, shape index: {}]
  %s3 = inlined_call_operand.hbm [shape: f32[256,128], index: 3, kind: output, shape index: {}]
  %s4 = sld [smem:[#allocation0]]
  $region45: #{mha_forward.9} parent=0
    _
  %s6 = ssub.s32 1, %s4
  %s7 = scalar_select 0, %s6, %s4
  $region1: #{mha_forward.9} parent=0
    #allocation2 [shape = 'u8[131072]{0}', space=vmem, size = 0x20000, scoped, tag = 'output window, operand 0']
    #allocation3 [shape = 's32[2]{0}', space=sflag, size = 0x8, scoped, tag = 'scoped memory for mha_forward.9']
    %8 = vsyncpa [#allocation3], 0
    %s9 = scalar_lea.sflag [#allocation3], 1
    %10 = vsyncpa %s9, 0
    loop: start=0, step=1, limit=4
    $region2: #{mha_forward.9} parent=1 // loop_pre_header
      _
    $region3: #{mha_forward.9} parent=1 // loop_header
      %s12 = sphi 0, %s16
      %p13 = scmp.ge.s32.totalorder %s12, 4
      %s22 = sphi 0, %s24
      %s25 = sphi 0, %s22
      %s26 = sphi 0, %s25
      %s42 = sphi 0, %s26
      %s46 = sphi 0, %s46
      %s48 = sphi 0, %s46
      %s49 = sphi 0, %s48
      %s63 = sphi 0, %s49
      %s67 = sphi 0, %s67
      %s69 = sphi 0, %s67
      %s70 = sphi 0, %s69
      %s84 = sphi 0, %s70
      %s90 = sphi 0, %s92
      %s93 = sphi 0, %s90
      %s94 = sphi 0, %s93
      %s110 = sphi 0, %s94
    $region4: #{mha_forward.9} parent=1 // loop_header_branch
      %15 = sbr.rel (%p13) target = $region8
    $region5: #{mha_forward.9} parent=1 // loop_body
      %s17 = ssub.s32 %s12, 1
      %s18 = ssub.s32 %s12, 2
      %s19 = sadd.s32 %s12, 1
      %s20 = ssub.s32 %s12, %s19
      %p21 = scmp.eq.s32.totalorder %s20, 0
      %s23 = sadd.s32 %s22, 1
      %s24 = scalar_select %p21, %s22, %s23
      %p27 = pneg %p21
      %p28 = scmp.eq.s32.totalorder %s12, 1
      %p29 = por %p27, %p28
      %p30 = scmp.ne.s32.totalorder %s22, %s25
      %p31 = scmp.eq.s32.totalorder %s12, 0
      %p32 = por %p30, %p31
      %p33 = scmp.ne.s32.totalorder %s22, %s25
      %p34 = scmp.eq.s32.totalorder %s17, 1
      %p35 = por %p33, %p34
      %p36 = scmp.ne.s32.totalorder %s25, %s26
      %p37 = scmp.eq.s32.totalorder %s17, 0
      %p38 = por %p36, %p37
      %p39 = scmp.ne.s32.totalorder %s25, %s26
      %p40 = scmp.eq.s32.totalorder %s18, 1
      %p41 = por %p39, %p40
      %p43 = scmp.ne.s32.totalorder %s26, %s42
      %p44 = scmp.eq.s32.totalorder %s18, 0
      %p45 = por %p43, %p44
      %s47 = sadd.s32 %s46, 1
      %p50 = scmp.eq.s32.totalorder %s12, 1
      %p51 = scmp.ne.s32.totalorder %s46, %s48
      %p52 = scmp.eq.s32.totalorder %s12, 0
      %p53 = por %p51, %p52
      %p54 = scmp.ne.s32.totalorder %s46, %s48
      %p55 = scmp.eq.s32.totalorder %s17, 1
      %p56 = por %p54, %p55
      %p57 = scmp.ne.s32.totalorder %s48, %s49
      %p58 = scmp.eq.s32.totalorder %s17, 0
      %p59 = por %p57, %p58
      %p60 = scmp.ne.s32.totalorder %s48, %s49
      %p61 = scmp.eq.s32.totalorder %s18, 1
      %p62 = por %p60, %p61
      %p64 = scmp.ne.s32.totalorder %s49, %s63
      %p65 = scmp.eq.s32.totalorder %s18, 0
      %p66 = por %p64, %p65
      %s68 = sadd.s32 %s67, 1
      %p71 = scmp.eq.s32.totalorder %s12, 1
      %p72 = scmp.ne.s32.totalorder %s67, %s69
      %p73 = scmp.eq.s32.totalorder %s12, 0
      %p74 = por %p72, %p73
      %p75 = scmp.ne.s32.totalorder %s67, %s69
      %p76 = scmp.eq.s32.totalorder %s17, 1
      %p77 = por %p75, %p76
      %p78 = scmp.ne.s32.totalorder %s69, %s70
      %p79 = scmp.eq.s32.totalorder %s17, 0
      %p80 = por %p78, %p79
      %p81 = scmp.ne.s32.totalorder %s69, %s70
      %p82 = scmp.eq.s32.totalorder %s18, 1
      %p83 = por %p81, %p82
      %p85 = scmp.ne.s32.totalorder %s70, %s84
      %p86 = scmp.eq.s32.totalorder %s18, 0
      %p87 = por %p85, %p86
      %s88 = ssub.s32 %s12, %s19
      %p89 = scmp.eq.s32.totalorder %s88, 0
      %s91 = sadd.s32 %s90, 1
      %s92 = scalar_select %p89, %s90, %s91
      %p95 = pneg %p89
      %p96 = scmp.eq.s32.totalorder %s12, 1
      %p97 = por %p95, %p96
      %p98 = scmp.ne.s32.totalorder %s90, %s93
      %p99 = scmp.eq.s32.totalorder %s12, 0
      %p100 = por %p98, %p99
      %p101 = scmp.ne.s32.totalorder %s90, %s93
      %p102 = scmp.eq.s32.totalorder %s17, 1
      %p103 = por %p101, %p102
      %p104 = scmp.ne.s32.totalorder %s93, %s94
      %p105 = scmp.eq.s32.totalorder %s17, 0
      %p106 = por %p104, %p105
      %p107 = scmp.ne.s32.totalorder %s93, %s94
      %p108 = scmp.eq.s32.totalorder %s18, 1
      %p109 = por %p107, %p108
      %p111 = scmp.ne.s32.totalorder %s94, %s110
      %p112 = scmp.eq.s32.totalorder %s18, 0
      %p113 = por %p111, %p112
      %p114 = scmp.le.s32.totalorder 1, %s12
      %p115 = scmp.lt.s32.totalorder %s12, 3
      %p116 = pnand %p114, %p115
      %p117 = pneg %p116
      // Predicated region
      $region9: #{mha_forward.9} parent=5 // pred_check
        _
      $region10: #{mha_forward.9} parent=5 // pred_check_branch
        %119 = sbr.rel (%p116) target = $region12
      $region11: #{mha_forward.9} parent=5 // pred_region
        %s120 = ssub.s32 %s12, 1
        // Predicated region
        $region13: #{mha_forward.9} parent=11 // pred_check
          %p121 = pneg %p59
        $region14: #{mha_forward.9} parent=11 // pred_check_branch
          %123 = sbr.rel (%p121) target = $region16
        $region15: #{mha_forward.9} parent=11 // pred_region
          _
        $region16: #{mha_forward.9} parent=11 // pred_fallthru
          _
        // Predicated region
        $region17: #{mha_forward.9} parent=11 // pred_check
          %p124 = pneg %p80
        $region18: #{mha_forward.9} parent=11 // pred_check_branch
          %126 = sbr.rel (%p124) target = $region20
        $region19: #{mha_forward.9} parent=11 // pred_region
          _
        $region20: #{mha_forward.9} parent=11 // pred_fallthru
          _
      $region12: #{mha_forward.9} parent=5 // pred_fallthru
        _
      %p127 = scmp.lt.s32.totalorder %s12, 2
      // Predicated region
      $region21: #{mha_forward.9} parent=5 // pred_check
        %p128 = pneg %p127
      $region22: #{mha_forward.9} parent=5 // pred_check_branch
        %130 = sbr.rel (%p128) target = $region24
      $region23: #{mha_forward.9} parent=5 // pred_region
        // Predicated region
        $region25: #{mha_forward.9} parent=23 // pred_check
          %p131 = pneg %p32
        $region26: #{mha_forward.9} parent=23 // pred_check_branch
          %133 = sbr.rel (%p131) target = $region28
        $region27: #{mha_forward.9} parent=23 // pred_region
          %s134 = smul.u32 16, %s12
          %p135 = scmp.lt.s32.totalorder %s134, 31
          %s136 = scalar_select %p135, %s134, 31
          %s137 = smul.addr %s136, 8
          %s138 = scalar_lea.vmem %s0, %s137
          %s139 = smul.u32 16, %s12
        $region28: #{mha_forward.9} parent=23 // pred_fallthru
          _
      $region24: #{mha_forward.9} parent=5 // pred_fallthru
        _
      %p140 = scmp.le.s32.totalorder 1, %s12
      %p141 = scmp.lt.s32.totalorder %s12, 3
      %p142 = pnand %p140, %p141
      %p143 = pneg %p142
      // Predicated region
      $region29: #{mha_forward.9} parent=5 // pred_check
        _
      $region30: #{mha_forward.9} parent=5 // pred_check_branch
        %145 = sbr.rel (%p142) target = $region32
      $region31: #{mha_forward.9} parent=5 // pred_region
        %s146 = ssub.s32 %s12, 1
        %s147 = smul.u32 16, %s17
        %p148 = scmp.lt.s32.totalorder %s147, 31
        %s149 = scalar_select %p148, %s147, 31
        %s150 = smul.addr %s149, 8
        %s151 = scalar_lea.vmem %s0, %s150
        %p152 = pneg %p38
        %p153 = pneg %p35
        %p154 = pneg %p59
        %p155 = pneg %p56
        %p156 = pneg %p80
        %p157 = pneg %p77
        %p158 = pneg %p106
        %p159 = pneg %p103
        %s160 = sand.u32 %s93, 1
        %s161 = scalar_lea.sflag [#allocation3], %s160
        %s162 = sand.u32 %s93, 1
        %s163 = smul.addr %s162, 128
        %s164 = scalar_lea.vmem [#allocation2], %s163
        %s165 = smul.u32 16, %s17
        %p166 = scmp.lt.s32.totalorder %s165, 31
        %s167 = scalar_select %p166, %s165, 31
        %s168 = smul.addr %s167, 8
        %s169 = scalar_lea.vmem %s0, %s168
        %s170 = smul.u32 16, %s17
        %s171 = smul.u32 16, %s17
        %v172 = vld [vmem:[%s169] sm:$0xff]
        %v173 = vld [vmem:[%s169 + $0x8] sm:$0xff]
        %v174 = vld [vmem:[%s169 + $0x10] sm:$0xff]
        %v175 = vld [vmem:[%s169 + $0x18] sm:$0xff]
        %v176 = vld [vmem:[%s169 + $0x20] sm:$0xff]
        %v177 = vld [vmem:[%s169 + $0x28] sm:$0xff]
        %v178 = vld [vmem:[%s169 + $0x30] sm:$0xff]
        %v179 = vld [vmem:[%s169 + $0x38] sm:$0xff]
        %v180 = vld [vmem:[%s169 + $0x40] sm:$0xff]
        %v181 = vld [vmem:[%s169 + $0x48] sm:$0xff]
        %v182 = vld [vmem:[%s169 + $0x50] sm:$0xff]
        %v183 = vld [vmem:[%s169 + $0x58] sm:$0xff]
        %v184 = vld [vmem:[%s169 + $0x60] sm:$0xff]
        %v185 = vld [vmem:[%s169 + $0x68] sm:$0xff]
        %v186 = vld [vmem:[%s169 + $0x70] sm:$0xff]
        %v187 = vld [vmem:[%s169 + $0x78] sm:$0xff]
        %v188 = vld [vmem:[%s1] sm:$0xff]
        %v189 = vld [vmem:[%s1 + $0x8] sm:$0xff]
        %v190 = vld [vmem:[%s1 + $0x10] sm:$0xff]
        %v191 = vld [vmem:[%s1 + $0x18] sm:$0xff]
        %v192 = vld [vmem:[%s1 + $0x20] sm:$0xff]
        %v193 = vld [vmem:[%s1 + $0x28] sm:$0xff]
        %v194 = vld [vmem:[%s1 + $0x30] sm:$0xff]
        %v195 = vld [vmem:[%s1 + $0x38] sm:$0xff]
        %v196 = vld [vmem:[%s1 + $0x40] sm:$0xff]
        %v197 = vld [vmem:[%s1 + $0x48] sm:$0xff]
        %v198 = vld [vmem:[%s1 + $0x50] sm:$0xff]
        %v199 = vld [vmem:[%s1 + $0x58] sm:$0xff]
        %v200 = vld [vmem:[%s1 + $0x60] sm:$0xff]
        %v201 = vld [vmem:[%s1 + $0x68] sm:$0xff]
        %v202 = vld [vmem:[%s1 + $0x70] sm:$0xff]
        %v203 = vld [vmem:[%s1 + $0x78] sm:$0xff]
        %v204 = vld [vmem:[%s2] sm:$0x1]
        %v206 = vlaneseq
        %v207 = vshrl.u32 %v206, 7
        %v208 = vsub.s32 0, %v207
        %v209 = vrot.slane %v204, %v208
        %211 = vmatprep.subr.mxu0 0.0
        %212 = vmatpush1.msra.mxu0 %v188
        %213 = vmatprep.subr.mxu0 0.0
        %214 = vmatpush1.msra.mxu0 %v189
        %215 = vmatprep.subr.mxu0 0.0
        %216 = vmatpush1.msra.mxu0 %v190
        %217 = vmatprep.subr.mxu0 0.0
        %218 = vmatpush1.msra.mxu0 %v191
        %219 = vmatprep.subr.mxu0 0.0
        %220 = vmatpush1.msra.mxu0 %v192
        %221 = vmatprep.subr.mxu0 0.0
        %222 = vmatpush1.msra.mxu0 %v193
        %223 = vmatprep.subr.mxu0 0.0
        %224 = vmatpush1.msra.mxu0 %v194
        %225 = vmatprep.subr.mxu0 0.0
        %226 = vmatpush1.msra.mxu0 %v195
        %227 = vmatprep.subr.mxu0 0.0
        %228 = vmatpush1.msra.mxu0 %v196
        %229 = vmatprep.subr.mxu0 0.0
        %230 = vmatpush1.msra.mxu0 %v197
        %231 = vmatprep.subr.mxu0 0.0
        %232 = vmatpush1.msra.mxu0 %v198
        %233 = vmatprep.subr.mxu0 0.0
        %234 = vmatpush1.msra.mxu0 %v199
        %235 = vmatprep.subr.mxu0 0.0
        %236 = vmatpush1.msra.mxu0 %v200
        %237 = vmatprep.subr.mxu0 0.0
        %238 = vmatpush1.msra.mxu0 %v201
        %239 = vmatprep.subr.mxu0 0.0
        %240 = vmatpush1.msra.mxu0 %v202
        %241 = vmatprep.subr.mxu0 0.0
        %242 = vmatpush1.msra.mxu0 %v203
        %243 = vmatprep.subr.mxu0 0.0
        %244 = vmatpush1.msra.mxu0 0.0
        %245 = vmatprep.subr.mxu0 0.0
        %246 = vmatpush1.msra.mxu0 0.0
        %247 = vmatprep.subr.mxu0 0.0
        %248 = vmatpush1.msra.mxu0 0.0
        %249 = vmatprep.subr.mxu0 0.0
        %250 = vmatpush1.msra.mxu0 0.0
        %251 = vmatprep.subr.mxu0 0.0
        %252 = vmatpush1.msra.mxu0 0.0
        %253 = vmatprep.subr.mxu0 0.0
        %254 = vmatpush1.msra.mxu0 0.0
        %255 = vmatprep.subr.mxu0 0.0
        %256 = vmatpush1.msra.mxu0 0.0
        %257 = vmatprep.subr.mxu0 0.0
        %258 = vmatpush1.msra.mxu0 0.0
        %259 = vmatprep.subr.mxu0 0.0
        %260 = vmatpush1.msra.mxu0 0.0
        %261 = vmatprep.subr.mxu0 0.0
        %262 = vmatpush1.msra.mxu0 0.0
        %263 = vmatprep.subr.mxu0 0.0
        %264 = vmatpush1.msra.mxu0 0.0
        %265 = vmatprep.subr.mxu0 0.0
        %266 = vmatpush1.msra.mxu0 0.0
        %267 = vmatprep.subr.mxu0 0.0
        %268 = vmatpush1.msra.mxu0 0.0
        %269 = vmatprep.subr.mxu0 0.0
        %270 = vmatpush1.msra.mxu0 0.0
        %271 = vmatprep.subr.mxu0 0.0
        %272 = vmatpush1.msra.mxu0 0.0
        %273 = vmatprep.subr.mxu0 0.0
        %274 = vmatpush1.msra.mxu0 0.0
        %275 = vmatprep.mubr.f32.mxu0 0.0
        %276 = vmatmul.mubr.f32.gmra.mrb[0].mxu0 %v172
        %v277 = vpop.f32.mrb[0].mxu0
        %v278 = vadd.f32 %v209, %v277
        %v279 = vpop.f32.mrb[0].mxu0
        %280 = vmatprep.mubr.f32.mxu0 0.0
        %281 = vmatmul.mubr.f32.gmra.mrb[0].mxu0 %v173
        %v282 = vpop.f32.mrb[0].mxu0
        %v283 = vadd.f32 %v209, %v282
        %v284 = vpop.f32.mrb[0].mxu0
        %285 = vmatprep.mubr.f32.mxu0 0.0
        %286 = vmatmul.mubr.f32.gmra.mrb[0].mxu0 %v174
        %v287 = vpop.f32.mrb[0].mxu0
        %v288 = vadd.f32 %v209, %v287
        %v289 = vpop.f32.mrb[0].mxu0
        %290 = vmatprep.mubr.f32.mxu0 0.0
        %291 = vmatmul.mubr.f32.gmra.mrb[0].mxu0 %v175
        %v292 = vpop.f32.mrb[0].mxu0
        %v293 = vadd.f32 %v209, %v292
        %v294 = vpop.f32.mrb[0].mxu0
        %295 = vmatprep.mubr.f32.mxu0 0.0
        %296 = vmatmul.mubr.f32.gmra.mrb[0].mxu0 %v176
        %v297 = vpop.f32.mrb[0].mxu0
        %v298 = vadd.f32 %v209, %v297
        %v299 = vpop.f32.mrb[0].mxu0
        %300 = vmatprep.mubr.f32.mxu0 0.0
        %301 = vmatmul.mubr.f32.gmra.mrb[0].mxu0 %v177
        %v302 = vpop.f32.mrb[0].mxu0
        %v303 = vadd.f32 %v209, %v302
        %v304 = vpop.f32.mrb[0].mxu0
        %305 = vmatprep.mubr.f32.mxu0 0.0
        %306 = vmatmul.mubr.f32.gmra.mrb[0].mxu0 %v178
        %v307 = vpop.f32.mrb[0].mxu0
        %v308 = vadd.f32 %v209, %v307
        %v309 = vpop.f32.mrb[0].mxu0
        %310 = vmatprep.mubr.f32.mxu0 0.0
        %311 = vmatmul.mubr.f32.gmra.mrb[0].mxu0 %v179
        %v312 = vpop.f32.mrb[0].mxu0
        %v313 = vadd.f32 %v209, %v312
        %v314 = vpop.f32.mrb[0].mxu0
        %315 = vmatprep.mubr.f32.mxu0 0.0
        %316 = vmatmul.mubr.f32.gmra.mrb[0].mxu0 %v180
        %v317 = vpop.f32.mrb[0].mxu0
        %v318 = vadd.f32 %v209, %v317
        %v319 = vpop.f32.mrb[0].mxu0
        %320 = vmatprep.mubr.f32.mxu0 0.0
        %321 = vmatmul.mubr.f32.gmra.mrb[0].mxu0 %v181
        %v322 = vpop.f32.mrb[0].mxu0
        %v323 = vadd.f32 %v209, %v322
        %v324 = vpop.f32.mrb[0].mxu0
        %325 = vmatprep.mubr.f32.mxu0 0.0
        %326 = vmatmul.mubr.f32.gmra.mrb[0].mxu0 %v182
        %v327 = vpop.f32.mrb[0].mxu0
        %v328 = vadd.f32 %v209, %v327
        %v329 = vpop.f32.mrb[0].mxu0
        %330 = vmatprep.mubr.f32.mxu0 0.0
        %331 = vmatmul.mubr.f32.gmra.mrb[0].mxu0 %v183
        %v332 = vpop.f32.mrb[0].mxu0
        %v333 = vadd.f32 %v209, %v332
        %v334 = vpop.f32.mrb[0].mxu0
        %335 = vmatprep.mubr.f32.mxu0 0.0
        %336 = vmatmul.mubr.f32.gmra.mrb[0].mxu0 %v184
        %v337 = vpop.f32.mrb[0].mxu0
        %v338 = vadd.f32 %v209, %v337
        %v339 = vpop.f32.mrb[0].mxu0
        %340 = vmatprep.mubr.f32.mxu0 0.0
        %341 = vmatmul.mubr.f32.gmra.mrb[0].mxu0 %v185
        %v342 = vpop.f32.mrb[0].mxu0
        %v343 = vadd.f32 %v209, %v342
        %v344 = vpop.f32.mrb[0].mxu0
        %345 = vmatprep.mubr.f32.mxu0 0.0
        %346 = vmatmul.mubr.f32.gmra.mrb[0].mxu0 %v186
        %v347 = vpop.f32.mrb[0].mxu0
        %v348 = vadd.f32 %v209, %v347
        %v349 = vpop.f32.mrb[0].mxu0
        %350 = vmatprep.mubr.f32.mxu0 0.0
        %351 = vmatmul.mubr.f32.gmra.mrb[0].mxu0 %v187
        %v352 = vpop.f32.mrb[0].mxu0
        %v353 = vadd.f32 %v209, %v352
        %v354 = vpop.f32.mrb[0].mxu0
        %355 = vdwg.mxu0
        %356 = vst [vmem:[%s164] sm:$0xff] %v278
        %357 = vst [vmem:[%s164 + $0x8] sm:$0xff] %v283
        %358 = vst [vmem:[%s164 + $0x10] sm:$0xff] %v288
        %359 = vst [vmem:[%s164 + $0x18] sm:$0xff] %v293
        %360 = vst [vmem:[%s164 + $0x20] sm:$0xff] %v298
        %361 = vst [vmem:[%s164 + $0x28] sm:$0xff] %v303
        %362 = vst [vmem:[%s164 + $0x30] sm:$0xff] %v308
        %363 = vst [vmem:[%s164 + $0x38] sm:$0xff] %v313
        %364 = vst [vmem:[%s164 + $0x40] sm:$0xff] %v318
        %365 = vst [vmem:[%s164 + $0x48] sm:$0xff] %v323
        %366 = vst [vmem:[%s164 + $0x50] sm:$0xff] %v328
        %367 = vst [vmem:[%s164 + $0x58] sm:$0xff] %v333
        %368 = vst [vmem:[%s164 + $0x60] sm:$0xff] %v338
        %369 = vst [vmem:[%s164 + $0x68] sm:$0xff] %v343
        %370 = vst [vmem:[%s164 + $0x70] sm:$0xff] %v348
        %371 = vst [vmem:[%s164 + $0x78] sm:$0xff] %v353
        %s372 = sand.u32 %s93, 1
        %s373 = scalar_lea.sflag [#allocation3], %s372
        %s374 = sand.u32 %s93, 1
        %s375 = smul.addr %s374, 128
        %s376 = scalar_lea.vmem [#allocation2], %s375
        // Predicated region
        $region33: #{mha_forward.9} parent=31 // pred_check
          %p377 = pneg %p103
        $region34: #{mha_forward.9} parent=31 // pred_check_branch
          %379 = sbr.rel (%p377) target = $region36
        $region35: #{mha_forward.9} parent=31 // pred_region
          %s380 = smul.u32 16, %s17
          %s382 = ssub.s32 2048, 2048
          %383 = vsyncadd %s373, %s382
          %s384 = smul.addr %s380, 128
          %s385 = scalar_lea.hbm %s3, %s384
          %s386 = sshll.u32 %s376, 4
          %s387 = int_to_ptr.vmem [resolvable:$true] %s386
          %392 = dma.vmem_to_hbm [thread:$0]  %s387, 2048, %s385, %s373, 128, 128, 8
        $region36: #{mha_forward.9} parent=31 // pred_fallthru
          _
      $region32: #{mha_forward.9} parent=5 // pred_fallthru
        _
      %p393 = scmp.le.s32.totalorder 2, %s12
      // Predicated region
      $region37: #{mha_forward.9} parent=5 // pred_check
        %p394 = pneg %p393
      $region38: #{mha_forward.9} parent=5 // pred_check_branch
        %396 = sbr.rel (%p394) target = $region40
      $region39: #{mha_forward.9} parent=5 // pred_region
        %s397 = ssub.s32 %s12, 2
        // Predicated region
        $region41: #{mha_forward.9} parent=39 // pred_check
          %p398 = pneg %p109
        $region42: #{mha_forward.9} parent=39 // pred_check_branch
          %400 = sbr.rel (%p398) target = $region44
        $region43: #{mha_forward.9} parent=39 // pred_region
          %s401 = sand.u32 %s94, 1
          %s402 = scalar_lea.sflag [#allocation3], %s401
          %s403 = sand.u32 %s94, 1
          %s404 = smul.addr %s403, 128
          %s405 = scalar_lea.vmem [#allocation2], %s404
          %406 = dma.done %s402, 2048
        $region44: #{mha_forward.9} parent=39 // pred_fallthru
          _
      $region40: #{mha_forward.9} parent=5 // pred_fallthru
        _
    $region6: #{mha_forward.9} parent=1 // loop_footer
      %s16 = sadd.s32 1, %s12
    $region7: #{mha_forward.9} parent=1 // loop_footer_branch
      %11 = sbr.rel target = $region3
    $region8: #{mha_forward.9} parent=1 // loop_exit
      _
    %407 = vsyncpa [#allocation3], 1
    %s408 = scalar_lea.sflag [#allocation3], 1
    %409 = vsyncpa %s408, 1

</llo_original>
